<compile_context>
chip_gen: v6e
topology: v6e:2x2x1
jax: 0.10.0
libtpu: 0.0.40
codegen_flags: <defaults>
</compile_context>

<pallas_src>
import functools

import jax
import jax.numpy as jnp
import numpy as np
from jax.experimental import pallas as pl
from jax.experimental.pallas import tpu as pltpu


# ---------------------------------------------------------------------------
# Pallas kernel
# ---------------------------------------------------------------------------
def _make_lstm_kernel(num_layers: int, hidden_size: int, T: int, B: int):
    """Builds a kernel closure for a fixed (static) number of layers / shapes."""
    H = hidden_size

    def kernel(*refs):
        # refs layout:
        #   x_ref (bf16, (T*B, I)),
        #   [w_ih_l (bf16), w_hh_l (bf16), b_l (f32)] * num_layers,
        #   w_lin (bf16), b_lin (f32),
        #   out_ref (f32, (B, O)),
        #   seq_ref (f32 scratch, (T*B, H))
        x_ref = refs[0]
        layer_refs = refs[1 : 1 + 3 * num_layers]
        w_lin_ref, b_lin_ref, out_ref, seq_ref = refs[1 + 3 * num_layers :]

        hb = None  # bf16 copy of the running hidden state (MXU operand)
        for layer in range(num_layers):
            w_ih = layer_refs[3 * layer + 0][...]   # (in_dim, 4H) bf16
            w_hh = layer_refs[3 * layer + 1][...]   # (H, 4H)      bf16
            b = layer_refs[3 * layer + 2][...]      # (1, 4H)      f32

            # ---- hoisted input projection: one big GEMM over all timesteps ----
            # x has no recurrent dependence, so project the whole sequence at once
            # and fold the bias in here (done once per layer, not per step).
            xin = x_ref[...] if layer == 0 else seq_ref[...].astype(jnp.bfloat16)
            gates_x = (
                jnp.dot(xin, w_ih, preferred_element_type=jnp.float32) + b
            )  # (T*B, 4H) f32

            last_layer = layer == num_layers - 1
            hb = jnp.zeros((B, H), jnp.bfloat16)
            c = jnp.zeros((B, H), jnp.float32)

            # Fully-unrolled static time loop: only h @ w_hh + gate math remain on
            # the serial chain.  PyTorch gate order is [i, f, g, o].
            for t in range(T):
                gates = gates_x[t * B : (t + 1) * B, :] + jnp.dot(
                    hb, w_hh, preferred_element_type=jnp.float32
                )
                i_g = jax.nn.sigmoid(gates[:, 0 * H : 1 * H])
                f_g = jax.nn.sigmoid(gates[:, 1 * H : 2 * H])
                g_g = jnp.tanh(gates[:, 2 * H : 3 * H])
                o_g = jax.nn.sigmoid(gates[:, 3 * H : 4 * H])
                c = f_g * c + i_g * g_g
                h = o_g * jnp.tanh(c)
                hb = h.astype(jnp.bfloat16)
                if not last_layer:
                    # Layer output sequence -> next layer's input (skipped on the
                    # last layer: only the final h is needed for the Linear head).
                    seq_ref[pl.ds(t * B, B), :] = h

        # Linear head on the top layer's final hidden state.
        out_ref[...] = (
            jnp.dot(hb, w_lin_ref[...], preferred_element_type=jnp.float32)
            + b_lin_ref[...]
        )

    return kernel


# ---------------------------------------------------------------------------
# Wrapper
# ---------------------------------------------------------------------------
@functools.partial(jax.jit, static_argnames=("num_layers",))
def simple_lstm_forward(x, params, *, num_layers):
    """x: (B, T, input_size) float32, batch_first (PyTorch convention)."""
    B, T, I = x.shape
    H = params["w_hh"][0].shape[0]
    O = params["w_lin"].shape[1]

    # Time-major, flattened (T*B, I) slab; MXU operands narrowed to bf16 (f32 accum
    # happens in-kernel via preferred_element_type).
    x2d = jnp.transpose(x, (1, 0, 2)).reshape(T * B, I).astype(jnp.bfloat16)

    args = [x2d]
    for l in range(num_layers):
        args += [
            params["w_ih"][l].astype(jnp.bfloat16),
            params["w_hh"][l].astype(jnp.bfloat16),
            params["b"][l],  # bias stays f32 (folded into the hoisted GEMM)
        ]
    args += [params["w_lin"].astype(jnp.bfloat16), params["b_lin"]]

    vmem_spec = pl.BlockSpec(memory_space=pltpu.MemorySpace.VMEM)

    kernel = _make_lstm_kernel(num_layers, H, T, B)
    return pl.pallas_call(
        kernel,
        out_shape=jax.ShapeDtypeStruct((B, O), jnp.float32),
        in_specs=[vmem_spec] * len(args),
        out_specs=vmem_spec,
        scratch_shapes=[pltpu.VMEM((T * B, H), jnp.float32)],
    )(*args)


# ---------------------------------------------------------------------------
# Deterministic parameter init (matches nn.LSTM / nn.Linear shapes)
# ---------------------------------------------------------------------------
def init_params(key, input_size, hidden_size, output_size, num_layers):
    H = hidden_size
    k_lstm = 1.0 / np.sqrt(H)

    def u(key, shape, bound):
        return jax.random.uniform(key, shape, jnp.float32, -bound, bound)

    params = {"w_ih": [], "w_hh": [], "b": []}
    for l in range(num_layers):
        in_dim = input_size if l == 0 else H
        key, k1, k2, k3, k4 = jax.random.split(key, 5)
        # stored pre-transposed: (in_dim, 4H), (H, 4H)
        params["w_ih"].append(u(k1, (in_dim, 4 * H), k_lstm))
        params["w_hh"].append(u(k2, (H, 4 * H), k_lstm))
        b_ih = u(k3, (1, 4 * H), k_lstm)
        b_hh = u(k4, (1, 4 * H), k_lstm)
        params["b"].append(b_ih + b_hh)

    key, k5, k6 = jax.random.split(key, 3)
    k_lin = 1.0 / np.sqrt(H)
    params["w_lin"] = u(k5, (H, output_size), k_lin)   # (H, O) = Linear.weight.T
    params["b_lin"] = u(k6, (1, output_size), k_lin)
    return params


# ---------------------------------------------------------------------------
# Pure-JAX f32 reference (for a correctness check)
# ---------------------------------------------------------------------------
def reference_forward(x, params, num_layers):
    B, T, I = x.shape
    H = params["w_hh"][0].shape[0]
    seq = x
    for l in range(num_layers):
        w_ih, w_hh, b = params["w_ih"][l], params["w_hh"][l], params["b"][l]

        def step(carry, xt):
            h, c = carry
            gates = xt @ w_ih + h @ w_hh + b
            i_g = jax.nn.sigmoid(gates[:, 0 * H : 1 * H])
            f_g = jax.nn.sigmoid(gates[:, 1 * H : 2 * H])
            g_g = jnp.tanh(gates[:, 2 * H : 3 * H])
            o_g = jax.nn.sigmoid(gates[:, 3 * H : 4 * H])
            c = f_g * c + i_g * g_g
            h = o_g * jnp.tanh(c)
            return (h, c), h

        h0 = jnp.zeros((B, H), jnp.float32)
        c0 = jnp.zeros((B, H), jnp.float32)
        (_, _), hs = jax.lax.scan(step, (h0, c0), jnp.transpose(seq, (1, 0, 2)))
        seq = jnp.transpose(hs, (1, 0, 2))
    return seq[:, -1, :] @ params["w_lin"] + params["b_lin"]


# ---------------------------------------------------------------------------
if __name__ == "__main__":
    # Small shapes implied by the module: batch=2, seq=8, input=16, hidden=32, out=4, layers=2
    B, T, INPUT, HIDDEN, OUTPUT, LAYERS = 2, 8, 16, 32, 4, 2

    key = jax.random.PRNGKey(0)
    key, kx = jax.random.split(key)
    x = jax.random.normal(kx, (B, T, INPUT), jnp.float32)

    params = init_params(key, INPUT, HIDDEN, OUTPUT, LAYERS)

    y = simple_lstm_forward(x, params, num_layers=LAYERS)
    y = jax.block_until_ready(y)

    # Kernel uses bf16 MXU operands (f32 accumulation / gate math); reference is pure
    # f32, so compare with a bf16-appropriate tolerance.
    y_ref = reference_forward(x, params, LAYERS)
    np.testing.assert_allclose(np.asarray(y), np.asarray(y_ref), rtol=3e-2, atol=3e-2)

    print("KERNEL_OK")
</pallas_src>

<mosaic_0001>
module attributes {stable_mosaic.version = 11 : i64} {
  func.func @kernel(%arg0: memref<16x16xbf16, #tpu.memory_space<vmem>>, %arg1: memref<16x128xbf16, #tpu.memory_space<vmem>>, %arg2: memref<32x128xbf16, #tpu.memory_space<vmem>>, %arg3: memref<1x128xf32, #tpu.memory_space<vmem>>, %arg4: memref<32x128xbf16, #tpu.memory_space<vmem>>, %arg5: memref<32x128xbf16, #tpu.memory_space<vmem>>, %arg6: memref<1x128xf32, #tpu.memory_space<vmem>>, %arg7: memref<32x4xbf16, #tpu.memory_space<vmem>>, %arg8: memref<1x4xf32, #tpu.memory_space<vmem>>, %arg9: memref<2x4xf32, #tpu.memory_space<vmem>>, %arg10: memref<16x32xf32, #tpu.memory_space<vmem>>) attributes {dimension_semantics = [], scalar_prefetch = 0 : i64, scratch_operands = 1 : i64, tpu.core_type = #tpu.core_type<tc>} {
    %c0 = arith.constant 0 : index
    %c0_0 = arith.constant 0 : index
    %0 = vector.load %arg1[%c0, %c0_0] : memref<16x128xbf16, #tpu.memory_space<vmem>>, vector<16x128xbf16>
    %c0_1 = arith.constant 0 : index
    %c0_2 = arith.constant 0 : index
    %1 = vector.load %arg2[%c0_1, %c0_2] : memref<32x128xbf16, #tpu.memory_space<vmem>>, vector<32x128xbf16>
    %c0_3 = arith.constant 0 : index
    %c0_4 = arith.constant 0 : index
    %2 = vector.load %arg3[%c0_3, %c0_4] : memref<1x128xf32, #tpu.memory_space<vmem>>, vector<1x128xf32>
    %c0_5 = arith.constant 0 : index
    %c0_6 = arith.constant 0 : index
    %3 = vector.load %arg0[%c0_5, %c0_6] : memref<16x16xbf16, #tpu.memory_space<vmem>>, vector<16x16xbf16>
    %cst = arith.constant dense<0.000000e+00> : vector<16x128xf32>
    %4 = tpu.matmul %3, %0, %cst {dimension_numbers = #tpu.dot_dimension_numbers<[1], [0], [0], [1], [0, 0, 1, 1], [], []>} : vector<16x16xbf16>, vector<16x128xbf16>, vector<16x128xf32> -> vector<16x128xf32>
    %5 = vector.broadcast %2 : vector<1x128xf32> to vector<16x128xf32>
    %6 = arith.addf %4, %5 : vector<16x128xf32>
    %cst_7 = arith.constant 0.000000e+00 : bf16
    %7 = vector.broadcast %cst_7 : bf16 to vector<2x32xbf16>
    %cst_8 = arith.constant 0.000000e+00 : f32
    %8 = vector.broadcast %cst_8 : f32 to vector<2x32xf32>
    %9 = vector.extract_strided_slice %6 {offsets = [0, 0], sizes = [2, 128], strides = [1, 1]} : vector<16x128xf32> to vector<2x128xf32>
    %cst_9 = arith.constant dense<0.000000e+00> : vector<2x128xf32>
    %10 = tpu.matmul %7, %1, %cst_9 {dimension_numbers = #tpu.dot_dimension_numbers<[1], [0], [0], [1], [0, 0, 1, 1], [], []>} : vector<2x32xbf16>, vector<32x128xbf16>, vector<2x128xf32> -> vector<2x128xf32>
    %11 = arith.addf %9, %10 : vector<2x128xf32>
    %12 = vector.extract_strided_slice %11 {offsets = [0, 0], sizes = [2, 32], strides = [1, 1]} : vector<2x128xf32> to vector<2x32xf32>
    %13 = arith.negf %12 : vector<2x32xf32>
    %14 = math.exp %13 : vector<2x32xf32>
    %cst_10 = arith.constant 1.000000e+00 : f32
    %15 = vector.broadcast %cst_10 : f32 to vector<2x32xf32>
    %16 = arith.addf %15, %14 : vector<2x32xf32>
    %17 = arith.divf %15, %16 : vector<2x32xf32>
    %18 = vector.extract_strided_slice %11 {offsets = [0, 32], sizes = [2, 32], strides = [1, 1]} : vector<2x128xf32> to vector<2x32xf32>
    %19 = arith.negf %18 : vector<2x32xf32>
    %20 = math.exp %19 : vector<2x32xf32>
    %cst_11 = arith.constant 1.000000e+00 : f32
    %21 = vector.broadcast %cst_11 : f32 to vector<2x32xf32>
    %22 = arith.addf %21, %20 : vector<2x32xf32>
    %23 = arith.divf %21, %22 : vector<2x32xf32>
    %24 = vector.extract_strided_slice %11 {offsets = [0, 64], sizes = [2, 32], strides = [1, 1]} : vector<2x128xf32> to vector<2x32xf32>
    %25 = math.tanh %24 : vector<2x32xf32>
    %26 = vector.extract_strided_slice %11 {offsets = [0, 96], sizes = [2, 32], strides = [1, 1]} : vector<2x128xf32> to vector<2x32xf32>
    %27 = arith.negf %26 : vector<2x32xf32>
    %28 = math.exp %27 : vector<2x32xf32>
    %cst_12 = arith.constant 1.000000e+00 : f32
    %29 = vector.broadcast %cst_12 : f32 to vector<2x32xf32>
    %30 = arith.addf %29, %28 : vector<2x32xf32>
    %31 = arith.divf %29, %30 : vector<2x32xf32>
    %32 = arith.mulf %23, %8 : vector<2x32xf32>
    %33 = arith.mulf %17, %25 : vector<2x32xf32>
    %34 = arith.addf %32, %33 : vector<2x32xf32>
    %35 = math.tanh %34 : vector<2x32xf32>
    %36 = arith.mulf %31, %35 : vector<2x32xf32>
    %37 = arith.truncf %36 : vector<2x32xf32> to vector<2x32xbf16>
    %c0_13 = arith.constant 0 : index
    %c0_14 = arith.constant 0 : index
    %38 = vector.load %arg10[%c0_13, %c0_14] : memref<16x32xf32, #tpu.memory_space<vmem>>, vector<2x32xf32>
    tpu.vector_store %arg10[%c0_13, %c0_14], %36 {strides = array<i32>} : memref<16x32xf32, #tpu.memory_space<vmem>>, vector<2x32xf32>,
    %39 = vector.extract_strided_slice %6 {offsets = [2, 0], sizes = [2, 128], strides = [1, 1]} : vector<16x128xf32> to vector<2x128xf32>
    %cst_15 = arith.constant dense<0.000000e+00> : vector<2x128xf32>
    %40 = tpu.matmul %37, %1, %cst_15 {dimension_numbers = #tpu.dot_dimension_numbers<[1], [0], [0], [1], [0, 0, 1, 1], [], []>} : vector<2x32xbf16>, vector<32x128xbf16>, vector<2x128xf32> -> vector<2x128xf32>
    %41 = arith.addf %39, %40 : vector<2x128xf32>
    %42 = vector.extract_strided_slice %41 {offsets = [0, 0], sizes = [2, 32], strides = [1, 1]} : vector<2x128xf32> to vector<2x32xf32>
    %43 = arith.negf %42 : vector<2x32xf32>
    %44 = math.exp %43 : vector<2x32xf32>
    %cst_16 = arith.constant 1.000000e+00 : f32
    %45 = vector.broadcast %cst_16 : f32 to vector<2x32xf32>
    %46 = arith.addf %45, %44 : vector<2x32xf32>
    %47 = arith.divf %45, %46 : vector<2x32xf32>
    %48 = vector.extract_strided_slice %41 {offsets = [0, 32], sizes = [2, 32], strides = [1, 1]} : vector<2x128xf32> to vector<2x32xf32>
    %49 = arith.negf %48 : vector<2x32xf32>
    %50 = math.exp %49 : vector<2x32xf32>
    %cst_17 = arith.constant 1.000000e+00 : f32
    %51 = vector.broadcast %cst_17 : f32 to vector<2x32xf32>
    %52 = arith.addf %51, %50 : vector<2x32xf32>
    %53 = arith.divf %51, %52 : vector<2x32xf32>
    %54 = vector.extract_strided_slice %41 {offsets = [0, 64], sizes = [2, 32], strides = [1, 1]} : vector<2x128xf32> to vector<2x32xf32>
    %55 = math.tanh %54 : vector<2x32xf32>
    %56 = vector.extract_strided_slice %41 {offsets = [0, 96], sizes = [2, 32], strides = [1, 1]} : vector<2x128xf32> to vector<2x32xf32>
    %57 = arith.negf %56 : vector<2x32xf32>
    %58 = math.exp %57 : vector<2x32xf32>
    %cst_18 = arith.constant 1.000000e+00 : f32
    %59 = vector.broadcast %cst_18 : f32 to vector<2x32xf32>
    %60 = arith.addf %59, %58 : vector<2x32xf32>
    %61 = arith.divf %59, %60 : vector<2x32xf32>
    %62 = arith.mulf %53, %34 : vector<2x32xf32>
    %63 = arith.mulf %47, %55 : vector<2x32xf32>
    %64 = arith.addf %62, %63 : vector<2x32xf32>
    %65 = math.tanh %64 : vector<2x32xf32>
    %66 = arith.mulf %61, %65 : vector<2x32xf32>
    %67 = arith.truncf %66 : vector<2x32xf32> to vector<2x32xbf16>
    %c2 = arith.constant 2 : index
    %c0_19 = arith.constant 0 : index
    %68 = vector.load %arg10[%c2, %c0_19] : memref<16x32xf32, #tpu.memory_space<vmem>>, vector<2x32xf32>
    tpu.vector_store %arg10[%c2, %c0_19], %66 {strides = array<i32>} : memref<16x32xf32, #tpu.memory_space<vmem>>, vector<2x32xf32>,
    %69 = vector.extract_strided_slice %6 {offsets = [4, 0], sizes = [2, 128], strides = [1, 1]} : vector<16x128xf32> to vector<2x128xf32>
    %cst_20 = arith.constant dense<0.000000e+00> : vector<2x128xf32>
    %70 = tpu.matmul %67, %1, %cst_20 {dimension_numbers = #tpu.dot_dimension_numbers<[1], [0], [0], [1], [0, 0, 1, 1], [], []>} : vector<2x32xbf16>, vector<32x128xbf16>, vector<2x128xf32> -> vector<2x128xf32>
    %71 = arith.addf %69, %70 : vector<2x128xf32>
    %72 = vector.extract_strided_slice %71 {offsets = [0, 0], sizes = [2, 32], strides = [1, 1]} : vector<2x128xf32> to vector<2x32xf32>
    %73 = arith.negf %72 : vector<2x32xf32>
    %74 = math.exp %73 : vector<2x32xf32>
    %cst_21 = arith.constant 1.000000e+00 : f32
    %75 = vector.broadcast %cst_21 : f32 to vector<2x32xf32>
    %76 = arith.addf %75, %74 : vector<2x32xf32>
    %77 = arith.divf %75, %76 : vector<2x32xf32>
    %78 = vector.extract_strided_slice %71 {offsets = [0, 32], sizes = [2, 32], strides = [1, 1]} : vector<2x128xf32> to vector<2x32xf32>
    %79 = arith.negf %78 : vector<2x32xf32>
    %80 = math.exp %79 : vector<2x32xf32>
    %cst_22 = arith.constant 1.000000e+00 : f32
    %81 = vector.broadcast %cst_22 : f32 to vector<2x32xf32>
    %82 = arith.addf %81, %80 : vector<2x32xf32>
    %83 = arith.divf %81, %82 : vector<2x32xf32>
    %84 = vector.extract_strided_slice %71 {offsets = [0, 64], sizes = [2, 32], strides = [1, 1]} : vector<2x128xf32> to vector<2x32xf32>
    %85 = math.tanh %84 : vector<2x32xf32>
    %86 = vector.extract_strided_slice %71 {offsets = [0, 96], sizes = [2, 32], strides = [1, 1]} : vector<2x128xf32> to vector<2x32xf32>
    %87 = arith.negf %86 : vector<2x32xf32>
    %88 = math.exp %87 : vector<2x32xf32>
    %cst_23 = arith.constant 1.000000e+00 : f32
    %89 = vector.broadcast %cst_23 : f32 to vector<2x32xf32>
    %90 = arith.addf %89, %88 : vector<2x32xf32>
    %91 = arith.divf %89, %90 : vector<2x32xf32>
    %92 = arith.mulf %83, %64 : vector<2x32xf32>
    %93 = arith.mulf %77, %85 : vector<2x32xf32>
    %94 = arith.addf %92, %93 : vector<2x32xf32>
    %95 = math.tanh %94 : vector<2x32xf32>
    %96 = arith.mulf %91, %95 : vector<2x32xf32>
    %97 = arith.truncf %96 : vector<2x32xf32> to vector<2x32xbf16>
    %c4 = arith.constant 4 : index
    %c0_24 = arith.constant 0 : index
    %98 = vector.load %arg10[%c4, %c0_24] : memref<16x32xf32, #tpu.memory_space<vmem>>, vector<2x32xf32>
    tpu.vector_store %arg10[%c4, %c0_24], %96 {strides = array<i32>} : memref<16x32xf32, #tpu.memory_space<vmem>>, vector<2x32xf32>,
    %99 = vector.extract_strided_slice %6 {offsets = [6, 0], sizes = [2, 128], strides = [1, 1]} : vector<16x128xf32> to vector<2x128xf32>
    %cst_25 = arith.constant dense<0.000000e+00> : vector<2x128xf32>
    %100 = tpu.matmul %97, %1, %cst_25 {dimension_numbers = #tpu.dot_dimension_numbers<[1], [0], [0], [1], [0, 0, 1, 1], [], []>} : vector<2x32xbf16>, vector<32x128xbf16>, vector<2x128xf32> -> vector<2x128xf32>
    %101 = arith.addf %99, %100 : vector<2x128xf32>
    %102 = vector.extract_strided_slice %101 {offsets = [0, 0], sizes = [2, 32], strides = [1, 1]} : vector<2x128xf32> to vector<2x32xf32>
    %103 = arith.negf %102 : vector<2x32xf32>
    %104 = math.exp %103 : vector<2x32xf32>
    %cst_26 = arith.constant 1.000000e+00 : f32
    %105 = vector.broadcast %cst_26 : f32 to vector<2x32xf32>
    %106 = arith.addf %105, %104 : vector<2x32xf32>
    %107 = arith.divf %105, %106 : vector<2x32xf32>
    %108 = vector.extract_strided_slice %101 {offsets = [0, 32], sizes = [2, 32], strides = [1, 1]} : vector<2x128xf32> to vector<2x32xf32>
    %109 = arith.negf %108 : vector<2x32xf32>
    %110 = math.exp %109 : vector<2x32xf32>
    %cst_27 = arith.constant 1.000000e+00 : f32
    %111 = vector.broadcast %cst_27 : f32 to vector<2x32xf32>
    %112 = arith.addf %111, %110 : vector<2x32xf32>
    %113 = arith.divf %111, %112 : vector<2x32xf32>
    %114 = vector.extract_strided_slice %101 {offsets = [0, 64], sizes = [2, 32], strides = [1, 1]} : vector<2x128xf32> to vector<2x32xf32>
    %115 = math.tanh %114 : vector<2x32xf32>
    %116 = vector.extract_strided_slice %101 {offsets = [0, 96], sizes = [2, 32], strides = [1, 1]} : vector<2x128xf32> to vector<2x32xf32>
    %117 = arith.negf %116 : vector<2x32xf32>
    %118 = math.exp %117 : vector<2x32xf32>
    %cst_28 = arith.constant 1.000000e+00 : f32
    %119 = vector.broadcast %cst_28 : f32 to vector<2x32xf32>
    %120 = arith.addf %119, %118 : vector<2x32xf32>
    %121 = arith.divf %119, %120 : vector<2x32xf32>
    %122 = arith.mulf %113, %94 : vector<2x32xf32>
    %123 = arith.mulf %107, %115 : vector<2x32xf32>
    %124 = arith.addf %122, %123 : vector<2x32xf32>
    %125 = math.tanh %124 : vector<2x32xf32>
    %126 = arith.mulf %121, %125 : vector<2x32xf32>
    %127 = arith.truncf %126 : vector<2x32xf32> to vector<2x32xbf16>
    %c6 = arith.constant 6 : index
    %c0_29 = arith.constant 0 : index
    %128 = vector.load %arg10[%c6, %c0_29] : memref<16x32xf32, #tpu.memory_space<vmem>>, vector<2x32xf32>
    tpu.vector_store %arg10[%c6, %c0_29], %126 {strides = array<i32>} : memref<16x32xf32, #tpu.memory_space<vmem>>, vector<2x32xf32>,
    %129 = vector.extract_strided_slice %6 {offsets = [8, 0], sizes = [2, 128], strides = [1, 1]} : vector<16x128xf32> to vector<2x128xf32>
    %cst_30 = arith.constant dense<0.000000e+00> : vector<2x128xf32>
    %130 = tpu.matmul %127, %1, %cst_30 {dimension_numbers = #tpu.dot_dimension_numbers<[1], [0], [0], [1], [0, 0, 1, 1], [], []>} : vector<2x32xbf16>, vector<32x128xbf16>, vector<2x128xf32> -> vector<2x128xf32>
    %131 = arith.addf %129, %130 : vector<2x128xf32>
    %132 = vector.extract_strided_slice %131 {offsets = [0, 0], sizes = [2, 32], strides = [1, 1]} : vector<2x128xf32> to vector<2x32xf32>
    %133 = arith.negf %132 : vector<2x32xf32>
    %134 = math.exp %133 : vector<2x32xf32>
    %cst_31 = arith.constant 1.000000e+00 : f32
    %135 = vector.broadcast %cst_31 : f32 to vector<2x32xf32>
    %136 = arith.addf %135, %134 : vector<2x32xf32>
    %137 = arith.divf %135, %136 : vector<2x32xf32>
    %138 = vector.extract_strided_slice %131 {offsets = [0, 32], sizes = [2, 32], strides = [1, 1]} : vector<2x128xf32> to vector<2x32xf32>
    %139 = arith.negf %138 : vector<2x32xf32>
    %140 = math.exp %139 : vector<2x32xf32>
    %cst_32 = arith.constant 1.000000e+00 : f32
    %141 = vector.broadcast %cst_32 : f32 to vector<2x32xf32>
    %142 = arith.addf %141, %140 : vector<2x32xf32>
    %143 = arith.divf %141, %142 : vector<2x32xf32>
    %144 = vector.extract_strided_slice %131 {offsets = [0, 64], sizes = [2, 32], strides = [1, 1]} : vector<2x128xf32> to vector<2x32xf32>
    %145 = math.tanh %144 : vector<2x32xf32>
    %146 = vector.extract_strided_slice %131 {offsets = [0, 96], sizes = [2, 32], strides = [1, 1]} : vector<2x128xf32> to vector<2x32xf32>
    %147 = arith.negf %146 : vector<2x32xf32>
    %148 = math.exp %147 : vector<2x32xf32>
    %cst_33 = arith.constant 1.000000e+00 : f32
    %149 = vector.broadcast %cst_33 : f32 to vector<2x32xf32>
    %150 = arith.addf %149, %148 : vector<2x32xf32>
    %151 = arith.divf %149, %150 : vector<2x32xf32>
    %152 = arith.mulf %143, %124 : vector<2x32xf32>
    %153 = arith.mulf %137, %145 : vector<2x32xf32>
    %154 = arith.addf %152, %153 : vector<2x32xf32>
    %155 = math.tanh %154 : vector<2x32xf32>
    %156 = arith.mulf %151, %155 : vector<2x32xf32>
    %157 = arith.truncf %156 : vector<2x32xf32> to vector<2x32xbf16>
    %c8 = arith.constant 8 : index
    %c0_34 = arith.constant 0 : index
    %158 = vector.load %arg10[%c8, %c0_34] : memref<16x32xf32, #tpu.memory_space<vmem>>, vector<2x32xf32>
    tpu.vector_store %arg10[%c8, %c0_34], %156 {strides = array<i32>} : memref<16x32xf32, #tpu.memory_space<vmem>>, vector<2x32xf32>,
    %159 = vector.extract_strided_slice %6 {offsets = [10, 0], sizes = [2, 128], strides = [1, 1]} : vector<16x128xf32> to vector<2x128xf32>
    %cst_35 = arith.constant dense<0.000000e+00> : vector<2x128xf32>
    %160 = tpu.matmul %157, %1, %cst_35 {dimension_numbers = #tpu.dot_dimension_numbers<[1], [0], [0], [1], [0, 0, 1, 1], [], []>} : vector<2x32xbf16>, vector<32x128xbf16>, vector<2x128xf32> -> vector<2x128xf32>
    %161 = arith.addf %159, %160 : vector<2x128xf32>
    %162 = vector.extract_strided_slice %161 {offsets = [0, 0], sizes = [2, 32], strides = [1, 1]} : vector<2x128xf32> to vector<2x32xf32>
    %163 = arith.negf %162 : vector<2x32xf32>
    %164 = math.exp %163 : vector<2x32xf32>
    %cst_36 = arith.constant 1.000000e+00 : f32
    %165 = vector.broadcast %cst_36 : f32 to vector<2x32xf32>
    %166 = arith.addf %165, %164 : vector<2x32xf32>
    %167 = arith.divf %165, %166 : vector<2x32xf32>
    %168 = vector.extract_strided_slice %161 {offsets = [0, 32], sizes = [2, 32], strides = [1, 1]} : vector<2x128xf32> to vector<2x32xf32>
    %169 = arith.negf %168 : vector<2x32xf32>
    %170 = math.exp %169 : vector<2x32xf32>
    %cst_37 = arith.constant 1.000000e+00 : f32
    %171 = vector.broadcast %cst_37 : f32 to vector<2x32xf32>
    %172 = arith.addf %171, %170 : vector<2x32xf32>
    %173 = arith.divf %171, %172 : vector<2x32xf32>
    %174 = vector.extract_strided_slice %161 {offsets = [0, 64], sizes = [2, 32], strides = [1, 1]} : vector<2x128xf32> to vector<2x32xf32>
    %175 = math.tanh %174 : vector<2x32xf32>
    %176 = vector.extract_strided_slice %161 {offsets = [0, 96], sizes = [2, 32], strides = [1, 1]} : vector<2x128xf32> to vector<2x32xf32>
    %177 = arith.negf %176 : vector<2x32xf32>
    %178 = math.exp %177 : vector<2x32xf32>
    %cst_38 = arith.constant 1.000000e+00 : f32
    %179 = vector.broadcast %cst_38 : f32 to vector<2x32xf32>
    %180 = arith.addf %179, %178 : vector<2x32xf32>
    %181 = arith.divf %179, %180 : vector<2x32xf32>
    %182 = arith.mulf %173, %154 : vector<2x32xf32>
    %183 = arith.mulf %167, %175 : vector<2x32xf32>
    %184 = arith.addf %182, %183 : vector<2x32xf32>
    %185 = math.tanh %184 : vector<2x32xf32>
    %186 = arith.mulf %181, %185 : vector<2x32xf32>
    %187 = arith.truncf %186 : vector<2x32xf32> to vector<2x32xbf16>
    %c10 = arith.constant 10 : index
    %c0_39 = arith.constant 0 : index
    %188 = vector.load %arg10[%c10, %c0_39] : memref<16x32xf32, #tpu.memory_space<vmem>>, vector<2x32xf32>
    tpu.vector_store %arg10[%c10, %c0_39], %186 {strides = array<i32>} : memref<16x32xf32, #tpu.memory_space<vmem>>, vector<2x32xf32>,
    %189 = vector.extract_strided_slice %6 {offsets = [12, 0], sizes = [2, 128], strides = [1, 1]} : vector<16x128xf32> to vector<2x128xf32>
    %cst_40 = arith.constant dense<0.000000e+00> : vector<2x128xf32>
    %190 = tpu.matmul %187, %1, %cst_40 {dimension_numbers = #tpu.dot_dimension_numbers<[1], [0], [0], [1], [0, 0, 1, 1], [], []>} : vector<2x32xbf16>, vector<32x128xbf16>, vector<2x128xf32> -> vector<2x128xf32>
    %191 = arith.addf %189, %190 : vector<2x128xf32>
    %192 = vector.extract_strided_slice %191 {offsets = [0, 0], sizes = [2, 32], strides = [1, 1]} : vector<2x128xf32> to vector<2x32xf32>
    %193 = arith.negf %192 : vector<2x32xf32>
    %194 = math.exp %193 : vector<2x32xf32>
    %cst_41 = arith.constant 1.000000e+00 : f32
    %195 = vector.broadcast %cst_41 : f32 to vector<2x32xf32>
    %196 = arith.addf %195, %194 : vector<2x32xf32>
    %197 = arith.divf %195, %196 : vector<2x32xf32>
    %198 = vector.extract_strided_slice %191 {offsets = [0, 32], sizes = [2, 32], strides = [1, 1]} : vector<2x128xf32> to vector<2x32xf32>
    %199 = arith.negf %198 : vector<2x32xf32>
    %200 = math.exp %199 : vector<2x32xf32>
    %cst_42 = arith.constant 1.000000e+00 : f32
    %201 = vector.broadcast %cst_42 : f32 to vector<2x32xf32>
    %202 = arith.addf %201, %200 : vector<2x32xf32>
    %203 = arith.divf %201, %202 : vector<2x32xf32>
    %204 = vector.extract_strided_slice %191 {offsets = [0, 64], sizes = [2, 32], strides = [1, 1]} : vector<2x128xf32> to vector<2x32xf32>
    %205 = math.tanh %204 : vector<2x32xf32>
    %206 = vector.extract_strided_slice %191 {offsets = [0, 96], sizes = [2, 32], strides = [1, 1]} : vector<2x128xf32> to vector<2x32xf32>
    %207 = arith.negf %206 : vector<2x32xf32>
    %208 = math.exp %207 : vector<2x32xf32>
    %cst_43 = arith.constant 1.000000e+00 : f32
    %209 = vector.broadcast %cst_43 : f32 to vector<2x32xf32>
    %210 = arith.addf %209, %208 : vector<2x32xf32>
    %211 = arith.divf %209, %210 : vector<2x32xf32>
    %212 = arith.mulf %203, %184 : vector<2x32xf32>
    %213 = arith.mulf %197, %205 : vector<2x32xf32>
    %214 = arith.addf %212, %213 : vector<2x32xf32>
    %215 = math.tanh %214 : vector<2x32xf32>
    %216 = arith.mulf %211, %215 : vector<2x32xf32>
    %217 = arith.truncf %216 : vector<2x32xf32> to vector<2x32xbf16>
    %c12 = arith.constant 12 : index
    %c0_44 = arith.constant 0 : index
    %218 = vector.load %arg10[%c12, %c0_44] : memref<16x32xf32, #tpu.memory_space<vmem>>, vector<2x32xf32>
    tpu.vector_store %arg10[%c12, %c0_44], %216 {strides = array<i32>} : memref<16x32xf32, #tpu.memory_space<vmem>>, vector<2x32xf32>,
    %219 = vector.extract_strided_slice %6 {offsets = [14, 0], sizes = [2, 128], strides = [1, 1]} : vector<16x128xf32> to vector<2x128xf32>
    %cst_45 = arith.constant dense<0.000000e+00> : vector<2x128xf32>
    %220 = tpu.matmul %217, %1, %cst_45 {dimension_numbers = #tpu.dot_dimension_numbers<[1], [0], [0], [1], [0, 0, 1, 1], [], []>} : vector<2x32xbf16>, vector<32x128xbf16>, vector<2x128xf32> -> vector<2x128xf32>
    %221 = arith.addf %219, %220 : vector<2x128xf32>
    %222 = vector.extract_strided_slice %221 {offsets = [0, 0], sizes = [2, 32], strides = [1, 1]} : vector<2x128xf32> to vector<2x32xf32>
    %223 = arith.negf %222 : vector<2x32xf32>
    %224 = math.exp %223 : vector<2x32xf32>
    %cst_46 = arith.constant 1.000000e+00 : f32
    %225 = vector.broadcast %cst_46 : f32 to vector<2x32xf32>
    %226 = arith.addf %225, %224 : vector<2x32xf32>
    %227 = arith.divf %225, %226 : vector<2x32xf32>
    %228 = vector.extract_strided_slice %221 {offsets = [0, 32], sizes = [2, 32], strides = [1, 1]} : vector<2x128xf32> to vector<2x32xf32>
    %229 = arith.negf %228 : vector<2x32xf32>
    %230 = math.exp %229 : vector<2x32xf32>
    %cst_47 = arith.constant 1.000000e+00 : f32
    %231 = vector.broadcast %cst_47 : f32 to vector<2x32xf32>
    %232 = arith.addf %231, %230 : vector<2x32xf32>
    %233 = arith.divf %231, %232 : vector<2x32xf32>
    %234 = vector.extract_strided_slice %221 {offsets = [0, 64], sizes = [2, 32], strides = [1, 1]} : vector<2x128xf32> to vector<2x32xf32>
    %235 = math.tanh %234 : vector<2x32xf32>
    %236 = vector.extract_strided_slice %221 {offsets = [0, 96], sizes = [2, 32], strides = [1, 1]} : vector<2x128xf32> to vector<2x32xf32>
    %237 = arith.negf %236 : vector<2x32xf32>
    %238 = math.exp %237 : vector<2x32xf32>
    %cst_48 = arith.constant 1.000000e+00 : f32
    %239 = vector.broadcast %cst_48 : f32 to vector<2x32xf32>
    %240 = arith.addf %239, %238 : vector<2x32xf32>
    %241 = arith.divf %239, %240 : vector<2x32xf32>
    %242 = arith.mulf %233, %214 : vector<2x32xf32>
    %243 = arith.mulf %227, %235 : vector<2x32xf32>
    %244 = arith.addf %242, %243 : vector<2x32xf32>
    %245 = math.tanh %244 : vector<2x32xf32>
    %246 = arith.mulf %241, %245 : vector<2x32xf32>
    %c14 = arith.constant 14 : index
    %c0_49 = arith.constant 0 : index
    %247 = vector.load %arg10[%c14, %c0_49] : memref<16x32xf32, #tpu.memory_space<vmem>>, vector<2x32xf32>
    tpu.vector_store %arg10[%c14, %c0_49], %246 {strides = array<i32>} : memref<16x32xf32, #tpu.memory_space<vmem>>, vector<2x32xf32>,
    %c0_50 = arith.constant 0 : index
    %c0_51 = arith.constant 0 : index
    %248 = vector.load %arg4[%c0_50, %c0_51] : memref<32x128xbf16, #tpu.memory_space<vmem>>, vector<32x128xbf16>
    %c0_52 = arith.constant 0 : index
    %c0_53 = arith.constant 0 : index
    %249 = vector.load %arg5[%c0_52, %c0_53] : memref<32x128xbf16, #tpu.memory_space<vmem>>, vector<32x128xbf16>
    %c0_54 = arith.constant 0 : index
    %c0_55 = arith.constant 0 : index
    %250 = vector.load %arg6[%c0_54, %c0_55] : memref<1x128xf32, #tpu.memory_space<vmem>>, vector<1x128xf32>
    %c0_56 = arith.constant 0 : index
    %c0_57 = arith.constant 0 : index
    %251 = vector.load %arg10[%c0_56, %c0_57] : memref<16x32xf32, #tpu.memory_space<vmem>>, vector<16x32xf32>
    %252 = arith.truncf %251 : vector<16x32xf32> to vector<16x32xbf16>
    %cst_58 = arith.constant dense<0.000000e+00> : vector<16x128xf32>
    %253 = tpu.matmul %252, %248, %cst_58 {dimension_numbers = #tpu.dot_dimension_numbers<[1], [0], [0], [1], [0, 0, 1, 1], [], []>} : vector<16x32xbf16>, vector<32x128xbf16>, vector<16x128xf32> -> vector<16x128xf32>
    %254 = vector.broadcast %250 : vector<1x128xf32> to vector<16x128xf32>
    %255 = arith.addf %253, %254 : vector<16x128xf32>
    %cst_59 = arith.constant 0.000000e+00 : bf16
    %256 = vector.broadcast %cst_59 : bf16 to vector<2x32xbf16>
    %cst_60 = arith.constant 0.000000e+00 : f32
    %257 = vector.broadcast %cst_60 : f32 to vector<2x32xf32>
    %258 = vector.extract_strided_slice %255 {offsets = [0, 0], sizes = [2, 128], strides = [1, 1]} : vector<16x128xf32> to vector<2x128xf32>
    %cst_61 = arith.constant dense<0.000000e+00> : vector<2x128xf32>
    %259 = tpu.matmul %256, %249, %cst_61 {dimension_numbers = #tpu.dot_dimension_numbers<[1], [0], [0], [1], [0, 0, 1, 1], [], []>} : vector<2x32xbf16>, vector<32x128xbf16>, vector<2x128xf32> -> vector<2x128xf32>
    %260 = arith.addf %258, %259 : vector<2x128xf32>
    %261 = vector.extract_strided_slice %260 {offsets = [0, 0], sizes = [2, 32], strides = [1, 1]} : vector<2x128xf32> to vector<2x32xf32>
    %262 = arith.negf %261 : vector<2x32xf32>
    %263 = math.exp %262 : vector<2x32xf32>
    %cst_62 = arith.constant 1.000000e+00 : f32
    %264 = vector.broadcast %cst_62 : f32 to vector<2x32xf32>
    %265 = arith.addf %264, %263 : vector<2x32xf32>
    %266 = arith.divf %264, %265 : vector<2x32xf32>
    %267 = vector.extract_strided_slice %260 {offsets = [0, 32], sizes = [2, 32], strides = [1, 1]} : vector<2x128xf32> to vector<2x32xf32>
    %268 = arith.negf %267 : vector<2x32xf32>
    %269 = math.exp %268 : vector<2x32xf32>
    %cst_63 = arith.constant 1.000000e+00 : f32
    %270 = vector.broadcast %cst_63 : f32 to vector<2x32xf32>
    %271 = arith.addf %270, %269 : vector<2x32xf32>
    %272 = arith.divf %270, %271 : vector<2x32xf32>
    %273 = vector.extract_strided_slice %260 {offsets = [0, 64], sizes = [2, 32], strides = [1, 1]} : vector<2x128xf32> to vector<2x32xf32>
    %274 = math.tanh %273 : vector<2x32xf32>
    %275 = vector.extract_strided_slice %260 {offsets = [0, 96], sizes = [2, 32], strides = [1, 1]} : vector<2x128xf32> to vector<2x32xf32>
    %276 = arith.negf %275 : vector<2x32xf32>
    %277 = math.exp %276 : vector<2x32xf32>
    %cst_64 = arith.constant 1.000000e+00 : f32
    %278 = vector.broadcast %cst_64 : f32 to vector<2x32xf32>
    %279 = arith.addf %278, %277 : vector<2x32xf32>
    %280 = arith.divf %278, %279 : vector<2x32xf32>
    %281 = arith.mulf %272, %257 : vector<2x32xf32>
    %282 = arith.mulf %266, %274 : vector<2x32xf32>
    %283 = arith.addf %281, %282 : vector<2x32xf32>
    %284 = math.tanh %283 : vector<2x32xf32>
    %285 = arith.mulf %280, %284 : vector<2x32xf32>
    %286 = arith.truncf %285 : vector<2x32xf32> to vector<2x32xbf16>
    %287 = vector.extract_strided_slice %255 {offsets = [2, 0], sizes = [2, 128], strides = [1, 1]} : vector<16x128xf32> to vector<2x128xf32>
    %cst_65 = arith.constant dense<0.000000e+00> : vector<2x128xf32>
    %288 = tpu.matmul %286, %249, %cst_65 {dimension_numbers = #tpu.dot_dimension_numbers<[1], [0], [0], [1], [0, 0, 1, 1], [], []>} : vector<2x32xbf16>, vector<32x128xbf16>, vector<2x128xf32> -> vector<2x128xf32>
    %289 = arith.addf %287, %288 : vector<2x128xf32>
    %290 = vector.extract_strided_slice %289 {offsets = [0, 0], sizes = [2, 32], strides = [1, 1]} : vector<2x128xf32> to vector<2x32xf32>
    %291 = arith.negf %290 : vector<2x32xf32>
    %292 = math.exp %291 : vector<2x32xf32>
    %cst_66 = arith.constant 1.000000e+00 : f32
    %293 = vector.broadcast %cst_66 : f32 to vector<2x32xf32>
    %294 = arith.addf %293, %292 : vector<2x32xf32>
    %295 = arith.divf %293, %294 : vector<2x32xf32>
    %296 = vector.extract_strided_slice %289 {offsets = [0, 32], sizes = [2, 32], strides = [1, 1]} : vector<2x128xf32> to vector<2x32xf32>
    %297 = arith.negf %296 : vector<2x32xf32>
    %298 = math.exp %297 : vector<2x32xf32>
    %cst_67 = arith.constant 1.000000e+00 : f32
    %299 = vector.broadcast %cst_67 : f32 to vector<2x32xf32>
    %300 = arith.addf %299, %298 : vector<2x32xf32>
    %301 = arith.divf %299, %300 : vector<2x32xf32>
    %302 = vector.extract_strided_slice %289 {offsets = [0, 64], sizes = [2, 32], strides = [1, 1]} : vector<2x128xf32> to vector<2x32xf32>
    %303 = math.tanh %302 : vector<2x32xf32>
    %304 = vector.extract_strided_slice %289 {offsets = [0, 96], sizes = [2, 32], strides = [1, 1]} : vector<2x128xf32> to vector<2x32xf32>
    %305 = arith.negf %304 : vector<2x32xf32>
    %306 = math.exp %305 : vector<2x32xf32>
    %cst_68 = arith.constant 1.000000e+00 : f32
    %307 = vector.broadcast %cst_68 : f32 to vector<2x32xf32>
    %308 = arith.addf %307, %306 : vector<2x32xf32>
    %309 = arith.divf %307, %308 : vector<2x32xf32>
    %310 = arith.mulf %301, %283 : vector<2x32xf32>
    %311 = arith.mulf %295, %303 : vector<2x32xf32>
    %312 = arith.addf %310, %311 : vector<2x32xf32>
    %313 = math.tanh %312 : vector<2x32xf32>
    %314 = arith.mulf %309, %313 : vector<2x32xf32>
    %315 = arith.truncf %314 : vector<2x32xf32> to vector<2x32xbf16>
    %316 = vector.extract_strided_slice %255 {offsets = [4, 0], sizes = [2, 128], strides = [1, 1]} : vector<16x128xf32> to vector<2x128xf32>
    %cst_69 = arith.constant dense<0.000000e+00> : vector<2x128xf32>
    %317 = tpu.matmul %315, %249, %cst_69 {dimension_numbers = #tpu.dot_dimension_numbers<[1], [0], [0], [1], [0, 0, 1, 1], [], []>} : vector<2x32xbf16>, vector<32x128xbf16>, vector<2x128xf32> -> vector<2x128xf32>
    %318 = arith.addf %316, %317 : vector<2x128xf32>
    %319 = vector.extract_strided_slice %318 {offsets = [0, 0], sizes = [2, 32], strides = [1, 1]} : vector<2x128xf32> to vector<2x32xf32>
    %320 = arith.negf %319 : vector<2x32xf32>
    %321 = math.exp %320 : vector<2x32xf32>
    %cst_70 = arith.constant 1.000000e+00 : f32
    %322 = vector.broadcast %cst_70 : f32 to vector<2x32xf32>
    %323 = arith.addf %322, %321 : vector<2x32xf32>
    %324 = arith.divf %322, %323 : vector<2x32xf32>
    %325 = vector.extract_strided_slice %318 {offsets = [0, 32], sizes = [2, 32], strides = [1, 1]} : vector<2x128xf32> to vector<2x32xf32>
    %326 = arith.negf %325 : vector<2x32xf32>
    %327 = math.exp %326 : vector<2x32xf32>
    %cst_71 = arith.constant 1.000000e+00 : f32
    %328 = vector.broadcast %cst_71 : f32 to vector<2x32xf32>
    %329 = arith.addf %328, %327 : vector<2x32xf32>
    %330 = arith.divf %328, %329 : vector<2x32xf32>
    %331 = vector.extract_strided_slice %318 {offsets = [0, 64], sizes = [2, 32], strides = [1, 1]} : vector<2x128xf32> to vector<2x32xf32>
    %332 = math.tanh %331 : vector<2x32xf32>
    %333 = vector.extract_strided_slice %318 {offsets = [0, 96], sizes = [2, 32], strides = [1, 1]} : vector<2x128xf32> to vector<2x32xf32>
    %334 = arith.negf %333 : vector<2x32xf32>
    %335 = math.exp %334 : vector<2x32xf32>
    %cst_72 = arith.constant 1.000000e+00 : f32
    %336 = vector.broadcast %cst_72 : f32 to vector<2x32xf32>
    %337 = arith.addf %336, %335 : vector<2x32xf32>
    %338 = arith.divf %336, %337 : vector<2x32xf32>
    %339 = arith.mulf %330, %312 : vector<2x32xf32>
    %340 = arith.mulf %324, %332 : vector<2x32xf32>
    %341 = arith.addf %339, %340 : vector<2x32xf32>
    %342 = math.tanh %341 : vector<2x32xf32>
    %343 = arith.mulf %338, %342 : vector<2x32xf32>
    %344 = arith.truncf %343 : vector<2x32xf32> to vector<2x32xbf16>
    %345 = vector.extract_strided_slice %255 {offsets = [6, 0], sizes = [2, 128], strides = [1, 1]} : vector<16x128xf32> to vector<2x128xf32>
    %cst_73 = arith.constant dense<0.000000e+00> : vector<2x128xf32>
    %346 = tpu.matmul %344, %249, %cst_73 {dimension_numbers = #tpu.dot_dimension_numbers<[1], [0], [0], [1], [0, 0, 1, 1], [], []>} : vector<2x32xbf16>, vector<32x128xbf16>, vector<2x128xf32> -> vector<2x128xf32>
    %347 = arith.addf %345, %346 : vector<2x128xf32>
    %348 = vector.extract_strided_slice %347 {offsets = [0, 0], sizes = [2, 32], strides = [1, 1]} : vector<2x128xf32> to vector<2x32xf32>
    %349 = arith.negf %348 : vector<2x32xf32>
    %350 = math.exp %349 : vector<2x32xf32>
    %cst_74 = arith.constant 1.000000e+00 : f32
    %351 = vector.broadcast %cst_74 : f32 to vector<2x32xf32>
    %352 = arith.addf %351, %350 : vector<2x32xf32>
    %353 = arith.divf %351, %352 : vector<2x32xf32>
    %354 = vector.extract_strided_slice %347 {offsets = [0, 32], sizes = [2, 32], strides = [1, 1]} : vector<2x128xf32> to vector<2x32xf32>
    %355 = arith.negf %354 : vector<2x32xf32>
    %356 = math.exp %355 : vector<2x32xf32>
    %cst_75 = arith.constant 1.000000e+00 : f32
    %357 = vector.broadcast %cst_75 : f32 to vector<2x32xf32>
    %358 = arith.addf %357, %356 : vector<2x32xf32>
    %359 = arith.divf %357, %358 : vector<2x32xf32>
    %360 = vector.extract_strided_slice %347 {offsets = [0, 64], sizes = [2, 32], strides = [1, 1]} : vector<2x128xf32> to vector<2x32xf32>
    %361 = math.tanh %360 : vector<2x32xf32>
    %362 = vector.extract_strided_slice %347 {offsets = [0, 96], sizes = [2, 32], strides = [1, 1]} : vector<2x128xf32> to vector<2x32xf32>
    %363 = arith.negf %362 : vector<2x32xf32>
    %364 = math.exp %363 : vector<2x32xf32>
    %cst_76 = arith.constant 1.000000e+00 : f32
    %365 = vector.broadcast %cst_76 : f32 to vector<2x32xf32>
    %366 = arith.addf %365, %364 : vector<2x32xf32>
    %367 = arith.divf %365, %366 : vector<2x32xf32>
    %368 = arith.mulf %359, %341 : vector<2x32xf32>
    %369 = arith.mulf %353, %361 : vector<2x32xf32>
    %370 = arith.addf %368, %369 : vector<2x32xf32>
    %371 = math.tanh %370 : vector<2x32xf32>
    %372 = arith.mulf %367, %371 : vector<2x32xf32>
    %373 = arith.truncf %372 : vector<2x32xf32> to vector<2x32xbf16>
    %374 = vector.extract_strided_slice %255 {offsets = [8, 0], sizes = [2, 128], strides = [1, 1]} : vector<16x128xf32> to vector<2x128xf32>
    %cst_77 = arith.constant dense<0.000000e+00> : vector<2x128xf32>
    %375 = tpu.matmul %373, %249, %cst_77 {dimension_numbers = #tpu.dot_dimension_numbers<[1], [0], [0], [1], [0, 0, 1, 1], [], []>} : vector<2x32xbf16>, vector<32x128xbf16>, vector<2x128xf32> -> vector<2x128xf32>
    %376 = arith.addf %374, %375 : vector<2x128xf32>
    %377 = vector.extract_strided_slice %376 {offsets = [0, 0], sizes = [2, 32], strides = [1, 1]} : vector<2x128xf32> to vector<2x32xf32>
    %378 = arith.negf %377 : vector<2x32xf32>
    %379 = math.exp %378 : vector<2x32xf32>
    %cst_78 = arith.constant 1.000000e+00 : f32
    %380 = vector.broadcast %cst_78 : f32 to vector<2x32xf32>
    %381 = arith.addf %380, %379 : vector<2x32xf32>
    %382 = arith.divf %380, %381 : vector<2x32xf32>
    %383 = vector.extract_strided_slice %376 {offsets = [0, 32], sizes = [2, 32], strides = [1, 1]} : vector<2x128xf32> to vector<2x32xf32>
    %384 = arith.negf %383 : vector<2x32xf32>
    %385 = math.exp %384 : vector<2x32xf32>
    %cst_79 = arith.constant 1.000000e+00 : f32
    %386 = vector.broadcast %cst_79 : f32 to vector<2x32xf32>
    %387 = arith.addf %386, %385 : vector<2x32xf32>
    %388 = arith.divf %386, %387 : vector<2x32xf32>
    %389 = vector.extract_strided_slice %376 {offsets = [0, 64], sizes = [2, 32], strides = [1, 1]} : vector<2x128xf32> to vector<2x32xf32>
    %390 = math.tanh %389 : vector<2x32xf32>
    %391 = vector.extract_strided_slice %376 {offsets = [0, 96], sizes = [2, 32], strides = [1, 1]} : vector<2x128xf32> to vector<2x32xf32>
    %392 = arith.negf %391 : vector<2x32xf32>
    %393 = math.exp %392 : vector<2x32xf32>
    %cst_80 = arith.constant 1.000000e+00 : f32
    %394 = vector.broadcast %cst_80 : f32 to vector<2x32xf32>
    %395 = arith.addf %394, %393 : vector<2x32xf32>
    %396 = arith.divf %394, %395 : vector<2x32xf32>
    %397 = arith.mulf %388, %370 : vector<2x32xf32>
    %398 = arith.mulf %382, %390 : vector<2x32xf32>
    %399 = arith.addf %397, %398 : vector<2x32xf32>
    %400 = math.tanh %399 : vector<2x32xf32>
    %401 = arith.mulf %396, %400 : vector<2x32xf32>
    %402 = arith.truncf %401 : vector<2x32xf32> to vector<2x32xbf16>
    %403 = vector.extract_strided_slice %255 {offsets = [10, 0], sizes = [2, 128], strides = [1, 1]} : vector<16x128xf32> to vector<2x128xf32>
    %cst_81 = arith.constant dense<0.000000e+00> : vector<2x128xf32>
    %404 = tpu.matmul %402, %249, %cst_81 {dimension_numbers = #tpu.dot_dimension_numbers<[1], [0], [0], [1], [0, 0, 1, 1], [], []>} : vector<2x32xbf16>, vector<32x128xbf16>, vector<2x128xf32> -> vector<2x128xf32>
    %405 = arith.addf %403, %404 : vector<2x128xf32>
    %406 = vector.extract_strided_slice %405 {offsets = [0, 0], sizes = [2, 32], strides = [1, 1]} : vector<2x128xf32> to vector<2x32xf32>
    %407 = arith.negf %406 : vector<2x32xf32>
    %408 = math.exp %407 : vector<2x32xf32>
    %cst_82 = arith.constant 1.000000e+00 : f32
    %409 = vector.broadcast %cst_82 : f32 to vector<2x32xf32>
    %410 = arith.addf %409, %408 : vector<2x32xf32>
    %411 = arith.divf %409, %410 : vector<2x32xf32>
    %412 = vector.extract_strided_slice %405 {offsets = [0, 32], sizes = [2, 32], strides = [1, 1]} : vector<2x128xf32> to vector<2x32xf32>
    %413 = arith.negf %412 : vector<2x32xf32>
    %414 = math.exp %413 : vector<2x32xf32>
    %cst_83 = arith.constant 1.000000e+00 : f32
    %415 = vector.broadcast %cst_83 : f32 to vector<2x32xf32>
    %416 = arith.addf %415, %414 : vector<2x32xf32>
    %417 = arith.divf %415, %416 : vector<2x32xf32>
    %418 = vector.extract_strided_slice %405 {offsets = [0, 64], sizes = [2, 32], strides = [1, 1]} : vector<2x128xf32> to vector<2x32xf32>
    %419 = math.tanh %418 : vector<2x32xf32>
    %420 = vector.extract_strided_slice %405 {offsets = [0, 96], sizes = [2, 32], strides = [1, 1]} : vector<2x128xf32> to vector<2x32xf32>
    %421 = arith.negf %420 : vector<2x32xf32>
    %422 = math.exp %421 : vector<2x32xf32>
    %cst_84 = arith.constant 1.000000e+00 : f32
    %423 = vector.broadcast %cst_84 : f32 to vector<2x32xf32>
    %424 = arith.addf %423, %422 : vector<2x32xf32>
    %425 = arith.divf %423, %424 : vector<2x32xf32>
    %426 = arith.mulf %417, %399 : vector<2x32xf32>
    %427 = arith.mulf %411, %419 : vector<2x32xf32>
    %428 = arith.addf %426, %427 : vector<2x32xf32>
    %429 = math.tanh %428 : vector<2x32xf32>
    %430 = arith.mulf %425, %429 : vector<2x32xf32>
    %431 = arith.truncf %430 : vector<2x32xf32> to vector<2x32xbf16>
    %432 = vector.extract_strided_slice %255 {offsets = [12, 0], sizes = [2, 128], strides = [1, 1]} : vector<16x128xf32> to vector<2x128xf32>
    %cst_85 = arith.constant dense<0.000000e+00> : vector<2x128xf32>
    %433 = tpu.matmul %431, %249, %cst_85 {dimension_numbers = #tpu.dot_dimension_numbers<[1], [0], [0], [1], [0, 0, 1, 1], [], []>} : vector<2x32xbf16>, vector<32x128xbf16>, vector<2x128xf32> -> vector<2x128xf32>
    %434 = arith.addf %432, %433 : vector<2x128xf32>
    %435 = vector.extract_strided_slice %434 {offsets = [0, 0], sizes = [2, 32], strides = [1, 1]} : vector<2x128xf32> to vector<2x32xf32>
    %436 = arith.negf %435 : vector<2x32xf32>
    %437 = math.exp %436 : vector<2x32xf32>
    %cst_86 = arith.constant 1.000000e+00 : f32
    %438 = vector.broadcast %cst_86 : f32 to vector<2x32xf32>
    %439 = arith.addf %438, %437 : vector<2x32xf32>
    %440 = arith.divf %438, %439 : vector<2x32xf32>
    %441 = vector.extract_strided_slice %434 {offsets = [0, 32], sizes = [2, 32], strides = [1, 1]} : vector<2x128xf32> to vector<2x32xf32>
    %442 = arith.negf %441 : vector<2x32xf32>
    %443 = math.exp %442 : vector<2x32xf32>
    %cst_87 = arith.constant 1.000000e+00 : f32
    %444 = vector.broadcast %cst_87 : f32 to vector<2x32xf32>
    %445 = arith.addf %444, %443 : vector<2x32xf32>
    %446 = arith.divf %444, %445 : vector<2x32xf32>
    %447 = vector.extract_strided_slice %434 {offsets = [0, 64], sizes = [2, 32], strides = [1, 1]} : vector<2x128xf32> to vector<2x32xf32>
    %448 = math.tanh %447 : vector<2x32xf32>
    %449 = vector.extract_strided_slice %434 {offsets = [0, 96], sizes = [2, 32], strides = [1, 1]} : vector<2x128xf32> to vector<2x32xf32>
    %450 = arith.negf %449 : vector<2x32xf32>
    %451 = math.exp %450 : vector<2x32xf32>
    %cst_88 = arith.constant 1.000000e+00 : f32
    %452 = vector.broadcast %cst_88 : f32 to vector<2x32xf32>
    %453 = arith.addf %452, %451 : vector<2x32xf32>
    %454 = arith.divf %452, %453 : vector<2x32xf32>
    %455 = arith.mulf %446, %428 : vector<2x32xf32>
    %456 = arith.mulf %440, %448 : vector<2x32xf32>
    %457 = arith.addf %455, %456 : vector<2x32xf32>
    %458 = math.tanh %457 : vector<2x32xf32>
    %459 = arith.mulf %454, %458 : vector<2x32xf32>
    %460 = arith.truncf %459 : vector<2x32xf32> to vector<2x32xbf16>
    %461 = vector.extract_strided_slice %255 {offsets = [14, 0], sizes = [2, 128], strides = [1, 1]} : vector<16x128xf32> to vector<2x128xf32>
    %cst_89 = arith.constant dense<0.000000e+00> : vector<2x128xf32>
    %462 = tpu.matmul %460, %249, %cst_89 {dimension_numbers = #tpu.dot_dimension_numbers<[1], [0], [0], [1], [0, 0, 1, 1], [], []>} : vector<2x32xbf16>, vector<32x128xbf16>, vector<2x128xf32> -> vector<2x128xf32>
    %463 = arith.addf %461, %462 : vector<2x128xf32>
    %464 = vector.extract_strided_slice %463 {offsets = [0, 0], sizes = [2, 32], strides = [1, 1]} : vector<2x128xf32> to vector<2x32xf32>
    %465 = arith.negf %464 : vector<2x32xf32>
    %466 = math.exp %465 : vector<2x32xf32>
    %cst_90 = arith.constant 1.000000e+00 : f32
    %467 = vector.broadcast %cst_90 : f32 to vector<2x32xf32>
    %468 = arith.addf %467, %466 : vector<2x32xf32>
    %469 = arith.divf %467, %468 : vector<2x32xf32>
    %470 = vector.extract_strided_slice %463 {offsets = [0, 32], sizes = [2, 32], strides = [1, 1]} : vector<2x128xf32> to vector<2x32xf32>
    %471 = arith.negf %470 : vector<2x32xf32>
    %472 = math.exp %471 : vector<2x32xf32>
    %cst_91 = arith.constant 1.000000e+00 : f32
    %473 = vector.broadcast %cst_91 : f32 to vector<2x32xf32>
    %474 = arith.addf %473, %472 : vector<2x32xf32>
    %475 = arith.divf %473, %474 : vector<2x32xf32>
    %476 = vector.extract_strided_slice %463 {offsets = [0, 64], sizes = [2, 32], strides = [1, 1]} : vector<2x128xf32> to vector<2x32xf32>
    %477 = math.tanh %476 : vector<2x32xf32>
    %478 = vector.extract_strided_slice %463 {offsets = [0, 96], sizes = [2, 32], strides = [1, 1]} : vector<2x128xf32> to vector<2x32xf32>
    %479 = arith.negf %478 : vector<2x32xf32>
    %480 = math.exp %479 : vector<2x32xf32>
    %cst_92 = arith.constant 1.000000e+00 : f32
    %481 = vector.broadcast %cst_92 : f32 to vector<2x32xf32>
    %482 = arith.addf %481, %480 : vector<2x32xf32>
    %483 = arith.divf %481, %482 : vector<2x32xf32>
    %484 = arith.mulf %475, %457 : vector<2x32xf32>
    %485 = arith.mulf %469, %477 : vector<2x32xf32>
    %486 = arith.addf %484, %485 : vector<2x32xf32>
    %487 = math.tanh %486 : vector<2x32xf32>
    %488 = arith.mulf %483, %487 : vector<2x32xf32>
    %489 = arith.truncf %488 : vector<2x32xf32> to vector<2x32xbf16>
    %c0_93 = arith.constant 0 : index
    %c0_94 = arith.constant 0 : index
    %490 = vector.load %arg7[%c0_93, %c0_94] : memref<32x4xbf16, #tpu.memory_space<vmem>>, vector<32x4xbf16>
    %cst_95 = arith.constant dense<0.000000e+00> : vector<2x4xf32>
    %491 = tpu.matmul %489, %490, %cst_95 {dimension_numbers = #tpu.dot_dimension_numbers<[1], [0], [0], [1], [0, 0, 1, 1], [], []>} : vector<2x32xbf16>, vector<32x4xbf16>, vector<2x4xf32> -> vector<2x4xf32>
    %c0_96 = arith.constant 0 : index
    %c0_97 = arith.constant 0 : index
    %492 = vector.load %arg8[%c0_96, %c0_97] : memref<1x4xf32, #tpu.memory_space<vmem>>, vector<1x4xf32>
    %493 = vector.broadcast %492 : vector<1x4xf32> to vector<2x4xf32>
    %494 = arith.addf %491, %493 : vector<2x4xf32>
    %c0_98 = arith.constant 0 : index
    %c0_99 = arith.constant 0 : index
    %495 = vector.load %arg9[%c0_98, %c0_99] : memref<2x4xf32, #tpu.memory_space<vmem>>, vector<2x4xf32>
    tpu.vector_store %arg9[%c0_98, %c0_99], %494 {strides = array<i32>} : memref<2x4xf32, #tpu.memory_space<vmem>>, vector<2x4xf32>,
    return
  }
}

</mosaic_0001>

<llo_original>
// kernel: simple_lstm_forward.1
$region0: #{simple_lstm_forward.1}
  #allocation0 [shape = 'u32[]', space=smem, size = 0x4, offset = 0x4, fixed_abs, tag = 'smem constant byte address 0x4 - core index']
  #allocation1 [shape = 'u32[144,128]{1,0:T(1,128)}', space=vmem, size = 0x12000, scoped, tag = 'internal scratch']
  #allocation2 [shape = 'f32[16,32]{1,0:T(8,128)}', space=vmem, size = 0x2000, scoped, tag = 'scratch operand']
  %s0 = inlined_call_operand.vmem [shape: bf16[16,16], index: 0, kind: input, shape index: {}]
  %s1 = inlined_call_operand.vmem [shape: bf16[16,128], index: 1, kind: input, shape index: {}]
  %s2 = inlined_call_operand.vmem [shape: bf16[32,128], index: 2, kind: input, shape index: {}]
  %s3 = inlined_call_operand.vmem [shape: f32[1,128], index: 3, kind: input, shape index: {}]
  %s4 = inlined_call_operand.vmem [shape: bf16[32,128], index: 4, kind: input, shape index: {}]
  %s5 = inlined_call_operand.vmem [shape: bf16[32,128], index: 5, kind: input, shape index: {}]
  %s6 = inlined_call_operand.vmem [shape: f32[1,128], index: 6, kind: input, shape index: {}]
  %s7 = inlined_call_operand.vmem [shape: bf16[32,4], index: 7, kind: input, shape index: {}]
  %s8 = inlined_call_operand.vmem [shape: f32[1,4], index: 8, kind: input, shape index: {}]
  %s9 = inlined_call_operand.hbm [shape: f32[2,4], index: 9, kind: output, shape index: {}]
  %s10 = sld [smem:[#allocation0]]
  $region46: #{simple_lstm_forward.1} parent=0
    _
  %s12 = ssub.s32 1, %s10
  %s13 = scalar_select 0, %s12, %s10
  $region1: #{simple_lstm_forward.1} parent=0
    #allocation3 [shape = 'u8[1024]{0}', space=vmem, size = 0x400, scoped, tag = 'output window, operand 0, single buffered']
    #allocation4 [shape = 's32[1]{0}', space=sflag, size = 0x4, scoped, tag = 'scoped memory for simple_lstm_forward.1']
    %14 = vsyncpa [#allocation4], 0
    // Predicated region
    $region2: #{simple_lstm_forward.1} parent=1 // pred_check
      _
    $region3: #{simple_lstm_forward.1} parent=1 // pred_check_branch
      %16 = sbr.rel (0) target = $region5
    $region4: #{simple_lstm_forward.1} parent=1 // pred_region
      _
    $region5: #{simple_lstm_forward.1} parent=1 // pred_fallthru
      _
    // Predicated region
    $region6: #{simple_lstm_forward.1} parent=1 // pred_check
      _
    $region7: #{simple_lstm_forward.1} parent=1 // pred_check_branch
      %18 = sbr.rel (0) target = $region9
    $region8: #{simple_lstm_forward.1} parent=1 // pred_region
      _
    $region9: #{simple_lstm_forward.1} parent=1 // pred_fallthru
      _
    // Predicated region
    $region10: #{simple_lstm_forward.1} parent=1 // pred_check
      _
    $region11: #{simple_lstm_forward.1} parent=1 // pred_check_branch
      %20 = sbr.rel (0) target = $region13
    $region12: #{simple_lstm_forward.1} parent=1 // pred_region
      _
    $region13: #{simple_lstm_forward.1} parent=1 // pred_fallthru
      _
    // Predicated region
    $region14: #{simple_lstm_forward.1} parent=1 // pred_check
      _
    $region15: #{simple_lstm_forward.1} parent=1 // pred_check_branch
      %22 = sbr.rel (0) target = $region17
    $region16: #{simple_lstm_forward.1} parent=1 // pred_region
      _
    $region17: #{simple_lstm_forward.1} parent=1 // pred_fallthru
      _
    // Predicated region
    $region18: #{simple_lstm_forward.1} parent=1 // pred_check
      _
    $region19: #{simple_lstm_forward.1} parent=1 // pred_check_branch
      %24 = sbr.rel (0) target = $region21
    $region20: #{simple_lstm_forward.1} parent=1 // pred_region
      _
    $region21: #{simple_lstm_forward.1} parent=1 // pred_fallthru
      _
    // Predicated region
    $region22: #{simple_lstm_forward.1} parent=1 // pred_check
      _
    $region23: #{simple_lstm_forward.1} parent=1 // pred_check_branch
      %26 = sbr.rel (0) target = $region25
    $region24: #{simple_lstm_forward.1} parent=1 // pred_region
      _
    $region25: #{simple_lstm_forward.1} parent=1 // pred_fallthru
      _
    // Predicated region
    $region26: #{simple_lstm_forward.1} parent=1 // pred_check
      _
    $region27: #{simple_lstm_forward.1} parent=1 // pred_check_branch
      %28 = sbr.rel (0) target = $region29
    $region28: #{simple_lstm_forward.1} parent=1 // pred_region
      _
    $region29: #{simple_lstm_forward.1} parent=1 // pred_fallthru
      _
    // Predicated region
    $region30: #{simple_lstm_forward.1} parent=1 // pred_check
      _
    $region31: #{simple_lstm_forward.1} parent=1 // pred_check_branch
      %30 = sbr.rel (0) target = $region33
    $region32: #{simple_lstm_forward.1} parent=1 // pred_region
      _
    $region33: #{simple_lstm_forward.1} parent=1 // pred_fallthru
      _
    // Predicated region
    $region34: #{simple_lstm_forward.1} parent=1 // pred_check
      _
    $region35: #{simple_lstm_forward.1} parent=1 // pred_check_branch
      %32 = sbr.rel (0) target = $region37
    $region36: #{simple_lstm_forward.1} parent=1 // pred_region
      _
    $region37: #{simple_lstm_forward.1} parent=1 // pred_fallthru
      _
    %v34 = vld [vmem:[%s1] sm:$0xf]
    %v35 = vld [vmem:[%s1 + $0x4] sm:$0xf]
    %v36 = vld [vmem:[%s2] sm:$0xf]
    %v37 = vld [vmem:[%s2 + $0x4] sm:$0xf]
    %v38 = vld [vmem:[%s2 + $0x8] sm:$0xf]
    %v39 = vld [vmem:[%s2 + $0xc] sm:$0xf]
    %v40 = vld [vmem:[%s3] sm:$0x1]
    %v41 = vld [vmem:[%s0] sm:$0xf]
    %v42 = vld [vmem:[%s0 + $0x4] sm:$0xf]
    %v44 = vlaneseq
    %v45 = vshrl.u32 %v44, 7
    %v46 = vsub.s32 0, %v45
    %v47 = vrot.slane %v40, %v46
    %v51 = vunpack.c.l.b16 %v41
    %v52 = vunpack.c.l.b16 %v42
    %v53 = vpack.c.b16 %v52, %v51
    %v56 = vunpack.c.l.b16 %v34
    %v57 = vunpack.c.l.b16 %v35
    %v58 = vpack.c.b16 %v57, %v56
    %vm60 = vcmask 130048
    %v62 = vsel %vm60, %v53, 0
    %64 = vmatprep.subr.bf16.mxu0 0
    %65 = vmatpush1.bf16.msra.mxu0 0
    %66 = vmatprep.subr.bf16.mxu0 0
    %67 = vmatpush1.bf16.msra.mxu0 0
    %68 = vmatprep.subr.bf16.mxu0 0
    %69 = vmatpush1.bf16.msra.mxu0 0
    %70 = vmatprep.subr.bf16.mxu0 0
    %71 = vmatpush1.bf16.msra.mxu0 0
    %72 = vmatprep.subr.bf16.mxu0 0
    %73 = vmatpush1.bf16.msra.mxu0 0
    %74 = vmatprep.subr.bf16.mxu0 0
    %75 = vmatpush1.bf16.msra.mxu0 0
    %76 = vmatprep.subr.bf16.mxu0 0
    %77 = vmatpush1.bf16.msra.mxu0 0
    %78 = vmatprep.subr.bf16.mxu0 0
    %79 = vmatpush1.bf16.msra.mxu0 %v58
    %80 = vmatprep.subr.bf16.mxu0 0
    %81 = vmatpush2.bf16.msra.mxu0 0
    %82 = vmatprep.subr.bf16.mxu0 0
    %83 = vmatpush2.bf16.msra.mxu0 0
    %84 = vmatprep.subr.bf16.mxu0 0
    %85 = vmatpush2.bf16.msra.mxu0 0
    %86 = vmatprep.subr.bf16.mxu0 0
    %87 = vmatpush2.bf16.msra.mxu0 0
    %88 = vmatprep.subr.bf16.mxu0 0
    %89 = vmatpush2.bf16.msra.mxu0 0
    %90 = vmatprep.subr.bf16.mxu0 0
    %91 = vmatpush2.bf16.msra.mxu0 0
    %92 = vmatprep.subr.bf16.mxu0 0
    %93 = vmatpush2.bf16.msra.mxu0 0
    %94 = vmatprep.subr.bf16.mxu0 0
    %95 = vmatpush2.bf16.msra.mxu0 0
    %96 = vmatprep.mubr.bf16.mxu0 0
    %97 = vmatmul.mubr.bf16.gmra.mxu0 %v62
    %v98 = vpop.f32.mrf.mxu0
    %v99 = vadd.f32 %v47, %v98
    %v100 = vpop.f32.mrf.mxu0
    %v101 = vpop.f32.mrf.mxu0
    %v102 = vadd.f32 %v47, %v101
    %v103 = vpop.f32.mrf.mxu0
    %104 = vdwg.mxu0
    %v109 = vunpack.c.l.b16 %v36
    %v110 = vunpack.c.l.b16 %v37
    %v111 = vunpack.c.l.b16 %v38
    %v112 = vunpack.c.l.b16 %v39
    %v113 = vpack.c.b16 %v110, %v109
    %v114 = vpack.c.b16 %v112, %v111
    %vm117 = vcmask 261120
    %v119 = vsel %vm117, 0, 0
    %121 = vmatprep.subr.bf16.mxu0 0
    %122 = vmatpush1.bf16.msra.mxu0 0
    %123 = vmatprep.subr.bf16.mxu0 0
    %124 = vmatpush1.bf16.msra.mxu0 0
    %125 = vmatprep.subr.bf16.mxu0 0
    %126 = vmatpush1.bf16.msra.mxu0 0
    %127 = vmatprep.subr.bf16.mxu0 0
    %128 = vmatpush1.bf16.msra.mxu0 0
    %129 = vmatprep.subr.bf16.mxu0 0
    %130 = vmatpush1.bf16.msra.mxu0 0
    %131 = vmatprep.subr.bf16.mxu0 0
    %132 = vmatpush1.bf16.msra.mxu0 0
    %133 = vmatprep.subr.bf16.mxu0 0
    %134 = vmatpush1.bf16.msra.mxu0 %v114
    %135 = vmatprep.subr.bf16.mxu0 0
    %136 = vmatpush1.bf16.msra.mxu0 %v113
    %137 = vmatprep.subr.bf16.mxu0 0
    %138 = vmatpush2.bf16.msra.mxu0 0
    %139 = vmatprep.subr.bf16.mxu0 0
    %140 = vmatpush2.bf16.msra.mxu0 0
    %141 = vmatprep.subr.bf16.mxu0 0
    %142 = vmatpush2.bf16.msra.mxu0 0
    %143 = vmatprep.subr.bf16.mxu0 0
    %144 = vmatpush2.bf16.msra.mxu0 0
    %145 = vmatprep.subr.bf16.mxu0 0
    %146 = vmatpush2.bf16.msra.mxu0 0
    %147 = vmatprep.subr.bf16.mxu0 0
    %148 = vmatpush2.bf16.msra.mxu0 0
    %149 = vmatprep.subr.bf16.mxu0 0
    %150 = vmatpush2.bf16.msra.mxu0 0
    %151 = vmatprep.subr.bf16.mxu0 0
    %152 = vmatpush2.bf16.msra.mxu0 0
    %153 = vmatprep.mubr.bf16.mxu0 0
    %154 = vmatmul.mubr.bf16.gmra.mxu0 %v119
    %v155 = vpop.f32.mrf.mxu0
    %v156 = vadd.f32 0.0, %v155
    %v157 = vpop.f32.mrf.mxu0
    %v158 = vpop.f32.mrf.mxu0
    %v159 = vpop.f32.mrf.mxu0
    %160 = vdwg.mxu0
    %v161 = vadd.f32 %v99, %v156
    %v162 = vxor.u32 %v161, 2147483648
    %v163 = vmul.f32 %v162, 1.442695
    %v164 = vpow.pop %v163
    %v165 = vadd.f32 %v164, 1.0
    %v166 = vrcp.pop %v165
    %v167 = vmul.f32 1.0, %v166
    %v168 = vtanh.pop %v161
    %v169 = vmul.f32 %v167, 0.0
    %171 = vrot.lane.b32.xlu0 %v168, 64
    %v172 = vpop.permute.xlu0 %171
    %v174 = vmul.f32 %v167, %v172
    %176 = vrot.lane.b32.xlu0 %v174, 32
    %v177 = vpop.permute.xlu0 %176
    %v179 = vadd.f32 %v169, %v177
    %v180 = vtanh.pop %v179
    %182 = vrot.lane.b32.xlu0 %v180, 64
    %v183 = vpop.permute.xlu0 %182
    %v185 = vmul.f32 %v167, %v183
    %v186 = vpack.c.bf16 %v185, %v185
    %188 = vrot.lane.b32.xlu0 %v185, 32
    %v189 = vpop.permute.xlu0 %188
    %vm191 = vcmask 254976
    %192 = vst.msk [vmem:[#allocation2] sm:$0x3] %vm191, %v189
    %194 = vrot.lane.b32.xlu0 %v186, 32
    %v195 = vpop.permute.xlu0 %194
    %v197 = vsel %vm117, %v195, 0
    %199 = vmatprep.subr.bf16.mxu0 0
    %200 = vmatpush1.bf16.msra.mxu0 0
    %201 = vmatprep.subr.bf16.mxu0 0
    %202 = vmatpush1.bf16.msra.mxu0 0
    %203 = vmatprep.subr.bf16.mxu0 0
    %204 = vmatpush1.bf16.msra.mxu0 0
    %205 = vmatprep.subr.bf16.mxu0 0
    %206 = vmatpush1.bf16.msra.mxu0 0
    %207 = vmatprep.subr.bf16.mxu0 0
    %208 = vmatpush1.bf16.msra.mxu0 0
    %209 = vmatprep.subr.bf16.mxu0 0
    %210 = vmatpush1.bf16.msra.mxu0 0
    %211 = vmatprep.subr.bf16.mxu0 0
    %212 = vmatpush1.bf16.msra.mxu0 %v114
    %213 = vmatprep.subr.bf16.mxu0 0
    %214 = vmatpush1.bf16.msra.mxu0 %v113
    %215 = vmatprep.subr.bf16.mxu0 0
    %216 = vmatpush2.bf16.msra.mxu0 0
    %217 = vmatprep.subr.bf16.mxu0 0
    %218 = vmatpush2.bf16.msra.mxu0 0
    %219 = vmatprep.subr.bf16.mxu0 0
    %220 = vmatpush2.bf16.msra.mxu0 0
    %221 = vmatprep.subr.bf16.mxu0 0
    %222 = vmatpush2.bf16.msra.mxu0 0
    %223 = vmatprep.subr.bf16.mxu0 0
    %224 = vmatpush2.bf16.msra.mxu0 0
    %225 = vmatprep.subr.bf16.mxu0 0
    %226 = vmatpush2.bf16.msra.mxu0 0
    %227 = vmatprep.subr.bf16.mxu0 0
    %228 = vmatpush2.bf16.msra.mxu0 0
    %229 = vmatprep.subr.bf16.mxu0 0
    %230 = vmatpush2.bf16.msra.mxu0 0
    %231 = vmatprep.mubr.bf16.mxu0 0
    %232 = vmatmul.mubr.bf16.gmra.mxu0 %v197
    %v233 = vpop.f32.mrf.mxu0
    %v234 = vadd.f32 0.0, %v233
    %v235 = vpop.f32.mrf.mxu0
    %v236 = vpop.f32.mrf.mxu0
    %v237 = vpop.f32.mrf.mxu0
    %238 = vdwg.mxu0
    %v240 = vrot.slane %v234, 6
    %v242 = vadd.f32 %v99, %v240
    %v243 = vxor.u32 %v242, 2147483648
    %v244 = vmul.f32 %v243, 1.442695
    %v245 = vpow.pop %v244
    %v246 = vadd.f32 %v245, 1.0
    %v247 = vrcp.pop %v246
    %v248 = vmul.f32 1.0, %v247
    %v249 = vtanh.pop %v242
    %v251 = vrot.slane %v179, 6
    %v253 = vmul.f32 %v248, %v251
    %255 = vrot.lane.b32.xlu0 %v249, 64
    %v256 = vpop.permute.xlu0 %255
    %v258 = vmul.f32 %v248, %v256
    %260 = vrot.lane.b32.xlu0 %v258, 32
    %v261 = vpop.permute.xlu0 %260
    %v263 = vadd.f32 %v253, %v261
    %v264 = vtanh.pop %v263
    %266 = vrot.lane.b32.xlu0 %v264, 64
    %v267 = vpop.permute.xlu0 %266
    %v269 = vmul.f32 %v248, %v267
    %v270 = vpack.c.bf16 %v269, %v269
    %272 = vrot.lane.b32.xlu0 %v269, 32
    %v273 = vpop.permute.xlu0 %272
    %vm275 = vcmask 257026
    %276 = vst.msk [vmem:[#allocation2] sm:$0xc] %vm275, %v273
    %v278 = vrot.slane %v270, 1
    %279 = vrot.lane.b32.xlu0 %v278, 32
    %v280 = vpop.permute.xlu0 %279
    %v282 = vsel %vm117, %v280, 0
    %284 = vmatprep.subr.bf16.mxu0 0
    %285 = vmatpush1.bf16.msra.mxu0 0
    %286 = vmatprep.subr.bf16.mxu0 0
    %287 = vmatpush1.bf16.msra.mxu0 0
    %288 = vmatprep.subr.bf16.mxu0 0
    %289 = vmatpush1.bf16.msra.mxu0 0
    %290 = vmatprep.subr.bf16.mxu0 0
    %291 = vmatpush1.bf16.msra.mxu0 0
    %292 = vmatprep.subr.bf16.mxu0 0
    %293 = vmatpush1.bf16.msra.mxu0 0
    %294 = vmatprep.subr.bf16.mxu0 0
    %295 = vmatpush1.bf16.msra.mxu0 0
    %296 = vmatprep.subr.bf16.mxu0 0
    %297 = vmatpush1.bf16.msra.mxu0 %v114
    %298 = vmatprep.subr.bf16.mxu0 0
    %299 = vmatpush1.bf16.msra.mxu0 %v113
    %300 = vmatprep.subr.bf16.mxu0 0
    %301 = vmatpush2.bf16.msra.mxu0 0
    %302 = vmatprep.subr.bf16.mxu0 0
    %303 = vmatpush2.bf16.msra.mxu0 0
    %304 = vmatprep.subr.bf16.mxu0 0
    %305 = vmatpush2.bf16.msra.mxu0 0
    %306 = vmatprep.subr.bf16.mxu0 0
    %307 = vmatpush2.bf16.msra.mxu0 0
    %308 = vmatprep.subr.bf16.mxu0 0
    %309 = vmatpush2.bf16.msra.mxu0 0
    %310 = vmatprep.subr.bf16.mxu0 0
    %311 = vmatpush2.bf16.msra.mxu0 0
    %312 = vmatprep.subr.bf16.mxu0 0
    %313 = vmatpush2.bf16.msra.mxu0 0
    %314 = vmatprep.subr.bf16.mxu0 0
    %315 = vmatpush2.bf16.msra.mxu0 0
    %316 = vmatprep.mubr.bf16.mxu0 0
    %317 = vmatmul.mubr.bf16.gmra.mxu0 %v282
    %v318 = vpop.f32.mrf.mxu0
    %v319 = vadd.f32 0.0, %v318
    %v320 = vpop.f32.mrf.mxu0
    %v321 = vpop.f32.mrf.mxu0
    %v322 = vpop.f32.mrf.mxu0
    %323 = vdwg.mxu0
    %v325 = vrot.slane %v319, 4
    %v327 = vadd.f32 %v99, %v325
    %v328 = vxor.u32 %v327, 2147483648
    %v329 = vmul.f32 %v328, 1.442695
    %v330 = vpow.pop %v329
    %v331 = vadd.f32 %v330, 1.0
    %v332 = vrcp.pop %v331
    %v333 = vmul.f32 1.0, %v332
    %v334 = vtanh.pop %v327
    %v336 = vrot.slane %v263, 6
    %v338 = vmul.f32 %v333, %v336
    %340 = vrot.lane.b32.xlu0 %v334, 64
    %v341 = vpop.permute.xlu0 %340
    %v343 = vmul.f32 %v333, %v341
    %345 = vrot.lane.b32.xlu0 %v343, 32
    %v346 = vpop.permute.xlu0 %345
    %v348 = vadd.f32 %v338, %v346
    %v349 = vtanh.pop %v348
    %351 = vrot.lane.b32.xlu0 %v349, 64
    %v352 = vpop.permute.xlu0 %351
    %v354 = vmul.f32 %v333, %v352
    %v355 = vpack.c.bf16 %v354, %v354
    %357 = vrot.lane.b32.xlu0 %v354, 32
    %v358 = vpop.permute.xlu0 %357
    %vm360 = vcmask 259076
    %361 = vst.msk [vmem:[#allocation2] sm:$0x30] %vm360, %v358
    %v363 = vrot.slane %v355, 2
    %364 = vrot.lane.b32.xlu0 %v363, 32
    %v365 = vpop.permute.xlu0 %364
    %v367 = vsel %vm117, %v365, 0
    %369 = vmatprep.subr.bf16.mxu0 0
    %370 = vmatpush1.bf16.msra.mxu0 0
    %371 = vmatprep.subr.bf16.mxu0 0
    %372 = vmatpush1.bf16.msra.mxu0 0
    %373 = vmatprep.subr.bf16.mxu0 0
    %374 = vmatpush1.bf16.msra.mxu0 0
    %375 = vmatprep.subr.bf16.mxu0 0
    %376 = vmatpush1.bf16.msra.mxu0 0
    %377 = vmatprep.subr.bf16.mxu0 0
    %378 = vmatpush1.bf16.msra.mxu0 0
    %379 = vmatprep.subr.bf16.mxu0 0
    %380 = vmatpush1.bf16.msra.mxu0 0
    %381 = vmatprep.subr.bf16.mxu0 0
    %382 = vmatpush1.bf16.msra.mxu0 %v114
    %383 = vmatprep.subr.bf16.mxu0 0
    %384 = vmatpush1.bf16.msra.mxu0 %v113
    %385 = vmatprep.subr.bf16.mxu0 0
    %386 = vmatpush2.bf16.msra.mxu0 0
    %387 = vmatprep.subr.bf16.mxu0 0
    %388 = vmatpush2.bf16.msra.mxu0 0
    %389 = vmatprep.subr.bf16.mxu0 0
    %390 = vmatpush2.bf16.msra.mxu0 0
    %391 = vmatprep.subr.bf16.mxu0 0
    %392 = vmatpush2.bf16.msra.mxu0 0
    %393 = vmatprep.subr.bf16.mxu0 0
    %394 = vmatpush2.bf16.msra.mxu0 0
    %395 = vmatprep.subr.bf16.mxu0 0
    %396 = vmatpush2.bf16.msra.mxu0 0
    %397 = vmatprep.subr.bf16.mxu0 0
    %398 = vmatpush2.bf16.msra.mxu0 0
    %399 = vmatprep.subr.bf16.mxu0 0
    %400 = vmatpush2.bf16.msra.mxu0 0
    %401 = vmatprep.mubr.bf16.mxu0 0
    %402 = vmatmul.mubr.bf16.gmra.mxu0 %v367
    %v403 = vpop.f32.mrf.mxu0
    %v404 = vadd.f32 0.0, %v403
    %v405 = vpop.f32.mrf.mxu0
    %v406 = vpop.f32.mrf.mxu0
    %v407 = vpop.f32.mrf.mxu0
    %408 = vdwg.mxu0
    %v410 = vrot.slane %v404, 2
    %v412 = vadd.f32 %v99, %v410
    %v413 = vxor.u32 %v412, 2147483648
    %v414 = vmul.f32 %v413, 1.442695
    %v415 = vpow.pop %v414
    %v416 = vadd.f32 %v415, 1.0
    %v417 = vrcp.pop %v416
    %v418 = vmul.f32 1.0, %v417
    %v419 = vtanh.pop %v412
    %v421 = vrot.slane %v348, 6
    %v423 = vmul.f32 %v418, %v421
    %425 = vrot.lane.b32.xlu0 %v419, 64
    %v426 = vpop.permute.xlu0 %425
    %v428 = vmul.f32 %v418, %v426
    %430 = vrot.lane.b32.xlu0 %v428, 32
    %v431 = vpop.permute.xlu0 %430
    %v433 = vadd.f32 %v423, %v431
    %v434 = vtanh.pop %v433
    %436 = vrot.lane.b32.xlu0 %v434, 64
    %v437 = vpop.permute.xlu0 %436
    %v439 = vmul.f32 %v418, %v437
    %v440 = vpack.c.bf16 %v439, %v439
    %442 = vrot.lane.b32.xlu0 %v439, 32
    %v443 = vpop.permute.xlu0 %442
    %vm445 = vcmask 261126
    %446 = vst.msk [vmem:[#allocation2] sm:$0xc0] %vm445, %v443
    %v448 = vrot.slane %v440, 3
    %449 = vrot.lane.b32.xlu0 %v448, 32
    %v450 = vpop.permute.xlu0 %449
    %v452 = vsel %vm117, %v450, 0
    %454 = vmatprep.subr.bf16.mxu0 0
    %455 = vmatpush1.bf16.msra.mxu0 0
    %456 = vmatprep.subr.bf16.mxu0 0
    %457 = vmatpush1.bf16.msra.mxu0 0
    %458 = vmatprep.subr.bf16.mxu0 0
    %459 = vmatpush1.bf16.msra.mxu0 0
    %460 = vmatprep.subr.bf16.mxu0 0
    %461 = vmatpush1.bf16.msra.mxu0 0
    %462 = vmatprep.subr.bf16.mxu0 0
    %463 = vmatpush1.bf16.msra.mxu0 0
    %464 = vmatprep.subr.bf16.mxu0 0
    %465 = vmatpush1.bf16.msra.mxu0 0
    %466 = vmatprep.subr.bf16.mxu0 0
    %467 = vmatpush1.bf16.msra.mxu0 %v114
    %468 = vmatprep.subr.bf16.mxu0 0
    %469 = vmatpush1.bf16.msra.mxu0 %v113
    %470 = vmatprep.subr.bf16.mxu0 0
    %471 = vmatpush2.bf16.msra.mxu0 0
    %472 = vmatprep.subr.bf16.mxu0 0
    %473 = vmatpush2.bf16.msra.mxu0 0
    %474 = vmatprep.subr.bf16.mxu0 0
    %475 = vmatpush2.bf16.msra.mxu0 0
    %476 = vmatprep.subr.bf16.mxu0 0
    %477 = vmatpush2.bf16.msra.mxu0 0
    %478 = vmatprep.subr.bf16.mxu0 0
    %479 = vmatpush2.bf16.msra.mxu0 0
    %480 = vmatprep.subr.bf16.mxu0 0
    %481 = vmatpush2.bf16.msra.mxu0 0
    %482 = vmatprep.subr.bf16.mxu0 0
    %483 = vmatpush2.bf16.msra.mxu0 0
    %484 = vmatprep.subr.bf16.mxu0 0
    %485 = vmatpush2.bf16.msra.mxu0 0
    %486 = vmatprep.mubr.bf16.mxu0 0
    %487 = vmatmul.mubr.bf16.gmra.mxu0 %v452
    %v488 = vpop.f32.mrf.mxu0
    %v489 = vadd.f32 0.0, %v488
    %v490 = vpop.f32.mrf.mxu0
    %v491 = vpop.f32.mrf.mxu0
    %v492 = vpop.f32.mrf.mxu0
    %493 = vdwg.mxu0
    %v494 = vadd.f32 %v102, %v489
    %v495 = vxor.u32 %v494, 2147483648
    %v496 = vmul.f32 %v495, 1.442695
    %v497 = vpow.pop %v496
    %v498 = vadd.f32 %v497, 1.0
    %v499 = vrcp.pop %v498
    %v500 = vmul.f32 1.0, %v499
    %v501 = vtanh.pop %v494
    %v503 = vrot.slane %v433, 6
    %v505 = vmul.f32 %v500, %v503
    %507 = vrot.lane.b32.xlu0 %v501, 64
    %v508 = vpop.permute.xlu0 %507
    %v510 = vmul.f32 %v500, %v508
    %512 = vrot.lane.b32.xlu0 %v510, 32
    %v513 = vpop.permute.xlu0 %512
    %v515 = vadd.f32 %v505, %v513
    %v516 = vtanh.pop %v515
    %518 = vrot.lane.b32.xlu0 %v516, 64
    %v519 = vpop.permute.xlu0 %518
    %v521 = vmul.f32 %v500, %v519
    %v522 = vpack.c.bf16 %v521, %v521
    %524 = vrot.lane.b32.xlu0 %v521, 32
    %v525 = vpop.permute.xlu0 %524
    %527 = vst.msk [vmem:[#allocation2 + $0x8] sm:$0x3] %vm191, %v525
    %529 = vrot.lane.b32.xlu0 %v522, 32
    %v530 = vpop.permute.xlu0 %529
    %v532 = vsel %vm117, %v530, 0
    %534 = vmatprep.subr.bf16.mxu0 0
    %535 = vmatpush1.bf16.msra.mxu0 0
    %536 = vmatprep.subr.bf16.mxu0 0
    %537 = vmatpush1.bf16.msra.mxu0 0
    %538 = vmatprep.subr.bf16.mxu0 0
    %539 = vmatpush1.bf16.msra.mxu0 0
    %540 = vmatprep.subr.bf16.mxu0 0
    %541 = vmatpush1.bf16.msra.mxu0 0
    %542 = vmatprep.subr.bf16.mxu0 0
    %543 = vmatpush1.bf16.msra.mxu0 0
    %544 = vmatprep.subr.bf16.mxu0 0
    %545 = vmatpush1.bf16.msra.mxu0 0
    %546 = vmatprep.subr.bf16.mxu0 0
    %547 = vmatpush1.bf16.msra.mxu0 %v114
    %548 = vmatprep.subr.bf16.mxu0 0
    %549 = vmatpush1.bf16.msra.mxu0 %v113
    %550 = vmatprep.subr.bf16.mxu0 0
    %551 = vmatpush2.bf16.msra.mxu0 0
    %552 = vmatprep.subr.bf16.mxu0 0
    %553 = vmatpush2.bf16.msra.mxu0 0
    %554 = vmatprep.subr.bf16.mxu0 0
    %555 = vmatpush2.bf16.msra.mxu0 0
    %556 = vmatprep.subr.bf16.mxu0 0
    %557 = vmatpush2.bf16.msra.mxu0 0
    %558 = vmatprep.subr.bf16.mxu0 0
    %559 = vmatpush2.bf16.msra.mxu0 0
    %560 = vmatprep.subr.bf16.mxu0 0
    %561 = vmatpush2.bf16.msra.mxu0 0
    %562 = vmatprep.subr.bf16.mxu0 0
    %563 = vmatpush2.bf16.msra.mxu0 0
    %564 = vmatprep.subr.bf16.mxu0 0
    %565 = vmatpush2.bf16.msra.mxu0 0
    %566 = vmatprep.mubr.bf16.mxu0 0
    %567 = vmatmul.mubr.bf16.gmra.mxu0 %v532
    %v568 = vpop.f32.mrf.mxu0
    %v569 = vadd.f32 0.0, %v568
    %v570 = vpop.f32.mrf.mxu0
    %v571 = vpop.f32.mrf.mxu0
    %v572 = vpop.f32.mrf.mxu0
    %573 = vdwg.mxu0
    %v575 = vrot.slane %v569, 6
    %v577 = vadd.f32 %v102, %v575
    %v578 = vxor.u32 %v577, 2147483648
    %v579 = vmul.f32 %v578, 1.442695
    %v580 = vpow.pop %v579
    %v581 = vadd.f32 %v580, 1.0
    %v582 = vrcp.pop %v581
    %v583 = vmul.f32 1.0, %v582
    %v584 = vtanh.pop %v577
    %v586 = vrot.slane %v515, 6
    %v588 = vmul.f32 %v583, %v586
    %590 = vrot.lane.b32.xlu0 %v584, 64
    %v591 = vpop.permute.xlu0 %590
    %v593 = vmul.f32 %v583, %v591
    %595 = vrot.lane.b32.xlu0 %v593, 32
    %v596 = vpop.permute.xlu0 %595
    %v598 = vadd.f32 %v588, %v596
    %v599 = vtanh.pop %v598
    %601 = vrot.lane.b32.xlu0 %v599, 64
    %v602 = vpop.permute.xlu0 %601
    %v604 = vmul.f32 %v583, %v602
    %v605 = vpack.c.bf16 %v604, %v604
    %607 = vrot.lane.b32.xlu0 %v604, 32
    %v608 = vpop.permute.xlu0 %607
    %610 = vst.msk [vmem:[#allocation2 + $0x8] sm:$0xc] %vm275, %v608
    %v612 = vrot.slane %v605, 1
    %613 = vrot.lane.b32.xlu0 %v612, 32
    %v614 = vpop.permute.xlu0 %613
    %v616 = vsel %vm117, %v614, 0
    %618 = vmatprep.subr.bf16.mxu0 0
    %619 = vmatpush1.bf16.msra.mxu0 0
    %620 = vmatprep.subr.bf16.mxu0 0
    %621 = vmatpush1.bf16.msra.mxu0 0
    %622 = vmatprep.subr.bf16.mxu0 0
    %623 = vmatpush1.bf16.msra.mxu0 0
    %624 = vmatprep.subr.bf16.mxu0 0
    %625 = vmatpush1.bf16.msra.mxu0 0
    %626 = vmatprep.subr.bf16.mxu0 0
    %627 = vmatpush1.bf16.msra.mxu0 0
    %628 = vmatprep.subr.bf16.mxu0 0
    %629 = vmatpush1.bf16.msra.mxu0 0
    %630 = vmatprep.subr.bf16.mxu0 0
    %631 = vmatpush1.bf16.msra.mxu0 %v114
    %632 = vmatprep.subr.bf16.mxu0 0
    %633 = vmatpush1.bf16.msra.mxu0 %v113
    %634 = vmatprep.subr.bf16.mxu0 0
    %635 = vmatpush2.bf16.msra.mxu0 0
    %636 = vmatprep.subr.bf16.mxu0 0
    %637 = vmatpush2.bf16.msra.mxu0 0
    %638 = vmatprep.subr.bf16.mxu0 0
    %639 = vmatpush2.bf16.msra.mxu0 0
    %640 = vmatprep.subr.bf16.mxu0 0
    %641 = vmatpush2.bf16.msra.mxu0 0
    %642 = vmatprep.subr.bf16.mxu0 0
    %643 = vmatpush2.bf16.msra.mxu0 0
    %644 = vmatprep.subr.bf16.mxu0 0
    %645 = vmatpush2.bf16.msra.mxu0 0
    %646 = vmatprep.subr.bf16.mxu0 0
    %647 = vmatpush2.bf16.msra.mxu0 0
    %648 = vmatprep.subr.bf16.mxu0 0
    %649 = vmatpush2.bf16.msra.mxu0 0
    %650 = vmatprep.mubr.bf16.mxu0 0
    %651 = vmatmul.mubr.bf16.gmra.mxu0 %v616
    %v652 = vpop.f32.mrf.mxu0
    %v653 = vadd.f32 0.0, %v652
    %v654 = vpop.f32.mrf.mxu0
    %v655 = vpop.f32.mrf.mxu0
    %v656 = vpop.f32.mrf.mxu0
    %657 = vdwg.mxu0
    %v659 = vrot.slane %v653, 4
    %v661 = vadd.f32 %v102, %v659
    %v662 = vxor.u32 %v661, 2147483648
    %v663 = vmul.f32 %v662, 1.442695
    %v664 = vpow.pop %v663
    %v665 = vadd.f32 %v664, 1.0
    %v666 = vrcp.pop %v665
    %v667 = vmul.f32 1.0, %v666
    %v668 = vtanh.pop %v661
    %v670 = vrot.slane %v598, 6
    %v672 = vmul.f32 %v667, %v670
    %674 = vrot.lane.b32.xlu0 %v668, 64
    %v675 = vpop.permute.xlu0 %674
    %v677 = vmul.f32 %v667, %v675
    %679 = vrot.lane.b32.xlu0 %v677, 32
    %v680 = vpop.permute.xlu0 %679
    %v682 = vadd.f32 %v672, %v680
    %v683 = vtanh.pop %v682
    %685 = vrot.lane.b32.xlu0 %v683, 64
    %v686 = vpop.permute.xlu0 %685
    %v688 = vmul.f32 %v667, %v686
    %v689 = vpack.c.bf16 %v688, %v688
    %691 = vrot.lane.b32.xlu0 %v688, 32
    %v692 = vpop.permute.xlu0 %691
    %694 = vst.msk [vmem:[#allocation2 + $0x8] sm:$0x30] %vm360, %v692
    %v696 = vrot.slane %v689, 2
    %697 = vrot.lane.b32.xlu0 %v696, 32
    %v698 = vpop.permute.xlu0 %697
    %v700 = vsel %vm117, %v698, 0
    %702 = vmatprep.subr.bf16.mxu0 0
    %703 = vmatpush1.bf16.msra.mxu0 0
    %704 = vmatprep.subr.bf16.mxu0 0
    %705 = vmatpush1.bf16.msra.mxu0 0
    %706 = vmatprep.subr.bf16.mxu0 0
    %707 = vmatpush1.bf16.msra.mxu0 0
    %708 = vmatprep.subr.bf16.mxu0 0
    %709 = vmatpush1.bf16.msra.mxu0 0
    %710 = vmatprep.subr.bf16.mxu0 0
    %711 = vmatpush1.bf16.msra.mxu0 0
    %712 = vmatprep.subr.bf16.mxu0 0
    %713 = vmatpush1.bf16.msra.mxu0 0
    %714 = vmatprep.subr.bf16.mxu0 0
    %715 = vmatpush1.bf16.msra.mxu0 %v114
    %716 = vmatprep.subr.bf16.mxu0 0
    %717 = vmatpush1.bf16.msra.mxu0 %v113
    %718 = vmatprep.subr.bf16.mxu0 0
    %719 = vmatpush2.bf16.msra.mxu0 0
    %720 = vmatprep.subr.bf16.mxu0 0
    %721 = vmatpush2.bf16.msra.mxu0 0
    %722 = vmatprep.subr.bf16.mxu0 0
    %723 = vmatpush2.bf16.msra.mxu0 0
    %724 = vmatprep.subr.bf16.mxu0 0
    %725 = vmatpush2.bf16.msra.mxu0 0
    %726 = vmatprep.subr.bf16.mxu0 0
    %727 = vmatpush2.bf16.msra.mxu0 0
    %728 = vmatprep.subr.bf16.mxu0 0
    %729 = vmatpush2.bf16.msra.mxu0 0
    %730 = vmatprep.subr.bf16.mxu0 0
    %731 = vmatpush2.bf16.msra.mxu0 0
    %732 = vmatprep.subr.bf16.mxu0 0
    %733 = vmatpush2.bf16.msra.mxu0 0
    %734 = vmatprep.mubr.bf16.mxu0 0
    %735 = vmatmul.mubr.bf16.gmra.mxu0 %v700
    %v736 = vpop.f32.mrf.mxu0
    %v737 = vadd.f32 0.0, %v736
    %v738 = vpop.f32.mrf.mxu0
    %v739 = vpop.f32.mrf.mxu0
    %v740 = vpop.f32.mrf.mxu0
    %741 = vdwg.mxu0
    %v743 = vrot.slane %v737, 2
    %v745 = vadd.f32 %v102, %v743
    %v746 = vxor.u32 %v745, 2147483648
    %v747 = vmul.f32 %v746, 1.442695
    %v748 = vpow.pop %v747
    %v749 = vadd.f32 %v748, 1.0
    %v750 = vrcp.pop %v749
    %v751 = vmul.f32 1.0, %v750
    %v752 = vtanh.pop %v745
    %v754 = vrot.slane %v682, 6
    %v756 = vmul.f32 %v751, %v754
    %758 = vrot.lane.b32.xlu0 %v752, 64
    %v759 = vpop.permute.xlu0 %758
    %v761 = vmul.f32 %v751, %v759
    %763 = vrot.lane.b32.xlu0 %v761, 32
    %v764 = vpop.permute.xlu0 %763
    %v766 = vadd.f32 %v756, %v764
    %v767 = vtanh.pop %v766
    %769 = vrot.lane.b32.xlu0 %v767, 64
    %v770 = vpop.permute.xlu0 %769
    %v772 = vmul.f32 %v751, %v770
    %774 = vrot.lane.b32.xlu0 %v772, 32
    %v775 = vpop.permute.xlu0 %774
    %777 = vst.msk [vmem:[#allocation2 + $0x8] sm:$0xc0] %vm445, %v775
    %v778 = vld [vmem:[%s4] sm:$0xf]
    %v779 = vld [vmem:[%s4 + $0x4] sm:$0xf]
    %v780 = vld [vmem:[%s4 + $0x8] sm:$0xf]
    %v781 = vld [vmem:[%s4 + $0xc] sm:$0xf]
    %v782 = vld [vmem:[%s5] sm:$0xf]
    %v783 = vld [vmem:[%s5 + $0x4] sm:$0xf]
    %v784 = vld [vmem:[%s5 + $0x8] sm:$0xf]
    %v785 = vld [vmem:[%s5 + $0xc] sm:$0xf]
    %v786 = vld [vmem:[%s6] sm:$0x1]
    %v787 = vld [vmem:[#allocation2] sm:$0xff]
    %v788 = vld [vmem:[#allocation2 + $0x8] sm:$0xff]
    %v789 = vpack.c.bf16 %v788, %v787
    %v791 = vlaneseq
    %v792 = vshrl.u32 %v791, 7
    %v793 = vsub.s32 0, %v792
    %v794 = vrot.slane %v786, %v793
    %v800 = vunpack.c.l.b16 %v778
    %v801 = vunpack.c.l.b16 %v779
    %v802 = vunpack.c.l.b16 %v780
    %v803 = vunpack.c.l.b16 %v781
    %v804 = vpack.c.b16 %v801, %v800
    %v805 = vpack.c.b16 %v803, %v802
    %v809 = vsel %vm117, %v789, 0
    %811 = vmatprep.subr.bf16.mxu0 0
    %812 = vmatpush1.bf16.msra.mxu0 0
    %813 = vmatprep.subr.bf16.mxu0 0
    %814 = vmatpush1.bf16.msra.mxu0 0
    %815 = vmatprep.subr.bf16.mxu0 0
    %816 = vmatpush1.bf16.msra.mxu0 0
    %817 = vmatprep.subr.bf16.mxu0 0
    %818 = vmatpush1.bf16.msra.mxu0 0
    %819 = vmatprep.subr.bf16.mxu0 0
    %820 = vmatpush1.bf16.msra.mxu0 0
    %821 = vmatprep.subr.bf16.mxu0 0
    %822 = vmatpush1.bf16.msra.mxu0 0
    %823 = vmatprep.subr.bf16.mxu0 0
    %824 = vmatpush1.bf16.msra.mxu0 %v805
    %825 = vmatprep.subr.bf16.mxu0 0
    %826 = vmatpush1.bf16.msra.mxu0 %v804
    %827 = vmatprep.subr.bf16.mxu0 0
    %828 = vmatpush2.bf16.msra.mxu0 0
    %829 = vmatprep.subr.bf16.mxu0 0
    %830 = vmatpush2.bf16.msra.mxu0 0
    %831 = vmatprep.subr.bf16.mxu0 0
    %832 = vmatpush2.bf16.msra.mxu0 0
    %833 = vmatprep.subr.bf16.mxu0 0
    %834 = vmatpush2.bf16.msra.mxu0 0
    %835 = vmatprep.subr.bf16.mxu0 0
    %836 = vmatpush2.bf16.msra.mxu0 0
    %837 = vmatprep.subr.bf16.mxu0 0
    %838 = vmatpush2.bf16.msra.mxu0 0
    %839 = vmatprep.subr.bf16.mxu0 0
    %840 = vmatpush2.bf16.msra.mxu0 0
    %841 = vmatprep.subr.bf16.mxu0 0
    %842 = vmatpush2.bf16.msra.mxu0 0
    %843 = vmatprep.mubr.bf16.mxu0 0
    %844 = vmatmul.mubr.bf16.gmra.mxu0 %v809
    %v845 = vpop.f32.mrf.mxu0
    %v846 = vadd.f32 %v794, %v845
    %v847 = vpop.f32.mrf.mxu0
    %v848 = vpop.f32.mrf.mxu0
    %v849 = vadd.f32 %v794, %v848
    %v850 = vpop.f32.mrf.mxu0
    %851 = vdwg.mxu0
    %v856 = vunpack.c.l.b16 %v782
    %v857 = vunpack.c.l.b16 %v783
    %v858 = vunpack.c.l.b16 %v784
    %v859 = vunpack.c.l.b16 %v785
    %v860 = vpack.c.b16 %v857, %v856
    %v861 = vpack.c.b16 %v859, %v858
    %864 = vmatprep.subr.bf16.mxu0 0
    %865 = vmatpush1.bf16.msra.mxu0 0
    %866 = vmatprep.subr.bf16.mxu0 0
    %867 = vmatpush1.bf16.msra.mxu0 0
    %868 = vmatprep.subr.bf16.mxu0 0
    %869 = vmatpush1.bf16.msra.mxu0 0
    %870 = vmatprep.subr.bf16.mxu0 0
    %871 = vmatpush1.bf16.msra.mxu0 0
    %872 = vmatprep.subr.bf16.mxu0 0
    %873 = vmatpush1.bf16.msra.mxu0 0
    %874 = vmatprep.subr.bf16.mxu0 0
    %875 = vmatpush1.bf16.msra.mxu0 0
    %876 = vmatprep.subr.bf16.mxu0 0
    %877 = vmatpush1.bf16.msra.mxu0 %v861
    %878 = vmatprep.subr.bf16.mxu0 0
    %879 = vmatpush1.bf16.msra.mxu0 %v860
    %880 = vmatprep.subr.bf16.mxu0 0
    %881 = vmatpush2.bf16.msra.mxu0 0
    %882 = vmatprep.subr.bf16.mxu0 0
    %883 = vmatpush2.bf16.msra.mxu0 0
    %884 = vmatprep.subr.bf16.mxu0 0
    %885 = vmatpush2.bf16.msra.mxu0 0
    %886 = vmatprep.subr.bf16.mxu0 0
    %887 = vmatpush2.bf16.msra.mxu0 0
    %888 = vmatprep.subr.bf16.mxu0 0
    %889 = vmatpush2.bf16.msra.mxu0 0
    %890 = vmatprep.subr.bf16.mxu0 0
    %891 = vmatpush2.bf16.msra.mxu0 0
    %892 = vmatprep.subr.bf16.mxu0 0
    %893 = vmatpush2.bf16.msra.mxu0 0
    %894 = vmatprep.subr.bf16.mxu0 0
    %895 = vmatpush2.bf16.msra.mxu0 0
    %896 = vmatprep.mubr.bf16.mxu0 0
    %897 = vmatmul.mubr.bf16.gmra.mxu0 %v119
    %v898 = vpop.f32.mrf.mxu0
    %v899 = vadd.f32 0.0, %v898
    %v900 = vpop.f32.mrf.mxu0
    %v901 = vpop.f32.mrf.mxu0
    %v902 = vpop.f32.mrf.mxu0
    %903 = vdwg.mxu0
    %v904 = vadd.f32 %v846, %v899
    %v905 = vxor.u32 %v904, 2147483648
    %v906 = vmul.f32 %v905, 1.442695
    %v907 = vpow.pop %v906
    %v908 = vadd.f32 %v907, 1.0
    %v909 = vrcp.pop %v908
    %v910 = vmul.f32 1.0, %v909
    %v911 = vtanh.pop %v904
    %v912 = vmul.f32 %v910, 0.0
    %914 = vrot.lane.b32.xlu0 %v911, 64
    %v915 = vpop.permute.xlu0 %914
    %v917 = vmul.f32 %v910, %v915
    %919 = vrot.lane.b32.xlu0 %v917, 32
    %v920 = vpop.permute.xlu0 %919
    %v922 = vadd.f32 %v912, %v920
    %v923 = vtanh.pop %v922
    %925 = vrot.lane.b32.xlu0 %v923, 64
    %v926 = vpop.permute.xlu0 %925
    %v928 = vmul.f32 %v910, %v926
    %v929 = vpack.c.bf16 %v928, %v928
    %931 = vrot.lane.b32.xlu0 %v929, 32
    %v932 = vpop.permute.xlu0 %931
    %v934 = vsel %vm117, %v932, 0
    %936 = vmatprep.subr.bf16.mxu0 0
    %937 = vmatpush1.bf16.msra.mxu0 0
    %938 = vmatprep.subr.bf16.mxu0 0
    %939 = vmatpush1.bf16.msra.mxu0 0
    %940 = vmatprep.subr.bf16.mxu0 0
    %941 = vmatpush1.bf16.msra.mxu0 0
    %942 = vmatprep.subr.bf16.mxu0 0
    %943 = vmatpush1.bf16.msra.mxu0 0
    %944 = vmatprep.subr.bf16.mxu0 0
    %945 = vmatpush1.bf16.msra.mxu0 0
    %946 = vmatprep.subr.bf16.mxu0 0
    %947 = vmatpush1.bf16.msra.mxu0 0
    %948 = vmatprep.subr.bf16.mxu0 0
    %949 = vmatpush1.bf16.msra.mxu0 %v861
    %950 = vmatprep.subr.bf16.mxu0 0
    %951 = vmatpush1.bf16.msra.mxu0 %v860
    %952 = vmatprep.subr.bf16.mxu0 0
    %953 = vmatpush2.bf16.msra.mxu0 0
    %954 = vmatprep.subr.bf16.mxu0 0
    %955 = vmatpush2.bf16.msra.mxu0 0
    %956 = vmatprep.subr.bf16.mxu0 0
    %957 = vmatpush2.bf16.msra.mxu0 0
    %958 = vmatprep.subr.bf16.mxu0 0
    %959 = vmatpush2.bf16.msra.mxu0 0
    %960 = vmatprep.subr.bf16.mxu0 0
    %961 = vmatpush2.bf16.msra.mxu0 0
    %962 = vmatprep.subr.bf16.mxu0 0
    %963 = vmatpush2.bf16.msra.mxu0 0
    %964 = vmatprep.subr.bf16.mxu0 0
    %965 = vmatpush2.bf16.msra.mxu0 0
    %966 = vmatprep.subr.bf16.mxu0 0
    %967 = vmatpush2.bf16.msra.mxu0 0
    %968 = vmatprep.mubr.bf16.mxu0 0
    %969 = vmatmul.mubr.bf16.gmra.mxu0 %v934
    %v970 = vpop.f32.mrf.mxu0
    %v971 = vadd.f32 0.0, %v970
    %v972 = vpop.f32.mrf.mxu0
    %v973 = vpop.f32.mrf.mxu0
    %v974 = vpop.f32.mrf.mxu0
    %975 = vdwg.mxu0
    %v977 = vrot.slane %v971, 6
    %v979 = vadd.f32 %v846, %v977
    %v980 = vxor.u32 %v979, 2147483648
    %v981 = vmul.f32 %v980, 1.442695
    %v982 = vpow.pop %v981
    %v983 = vadd.f32 %v982, 1.0
    %v984 = vrcp.pop %v983
    %v985 = vmul.f32 1.0, %v984
    %v986 = vtanh.pop %v979
    %v988 = vrot.slane %v922, 6
    %v990 = vmul.f32 %v985, %v988
    %992 = vrot.lane.b32.xlu0 %v986, 64
    %v993 = vpop.permute.xlu0 %992
    %v995 = vmul.f32 %v985, %v993
    %997 = vrot.lane.b32.xlu0 %v995, 32
    %v998 = vpop.permute.xlu0 %997
    %v1000 = vadd.f32 %v990, %v998
    %v1001 = vtanh.pop %v1000
    %1003 = vrot.lane.b32.xlu0 %v1001, 64
    %v1004 = vpop.permute.xlu0 %1003
    %v1006 = vmul.f32 %v985, %v1004
    %v1007 = vpack.c.bf16 %v1006, %v1006
    %v1009 = vrot.slane %v1007, 1
    %1010 = vrot.lane.b32.xlu0 %v1009, 32
    %v1011 = vpop.permute.xlu0 %1010
    %v1013 = vsel %vm117, %v1011, 0
    %1015 = vmatprep.subr.bf16.mxu0 0
    %1016 = vmatpush1.bf16.msra.mxu0 0
    %1017 = vmatprep.subr.bf16.mxu0 0
    %1018 = vmatpush1.bf16.msra.mxu0 0
    %1019 = vmatprep.subr.bf16.mxu0 0
    %1020 = vmatpush1.bf16.msra.mxu0 0
    %1021 = vmatprep.subr.bf16.mxu0 0
    %1022 = vmatpush1.bf16.msra.mxu0 0
    %1023 = vmatprep.subr.bf16.mxu0 0
    %1024 = vmatpush1.bf16.msra.mxu0 0
    %1025 = vmatprep.subr.bf16.mxu0 0
    %1026 = vmatpush1.bf16.msra.mxu0 0
    %1027 = vmatprep.subr.bf16.mxu0 0
    %1028 = vmatpush1.bf16.msra.mxu0 %v861
    %1029 = vmatprep.subr.bf16.mxu0 0
    %1030 = vmatpush1.bf16.msra.mxu0 %v860
    %1031 = vmatprep.subr.bf16.mxu0 0
    %1032 = vmatpush2.bf16.msra.mxu0 0
    %1033 = vmatprep.subr.bf16.mxu0 0
    %1034 = vmatpush2.bf16.msra.mxu0 0
    %1035 = vmatprep.subr.bf16.mxu0 0
    %1036 = vmatpush2.bf16.msra.mxu0 0
    %1037 = vmatprep.subr.bf16.mxu0 0
    %1038 = vmatpush2.bf16.msra.mxu0 0
    %1039 = vmatprep.subr.bf16.mxu0 0
    %1040 = vmatpush2.bf16.msra.mxu0 0
    %1041 = vmatprep.subr.bf16.mxu0 0
    %1042 = vmatpush2.bf16.msra.mxu0 0
    %1043 = vmatprep.subr.bf16.mxu0 0
    %1044 = vmatpush2.bf16.msra.mxu0 0
    %1045 = vmatprep.subr.bf16.mxu0 0
    %1046 = vmatpush2.bf16.msra.mxu0 0
    %1047 = vmatprep.mubr.bf16.mxu0 0
    %1048 = vmatmul.mubr.bf16.gmra.mxu0 %v1013
    %v1049 = vpop.f32.mrf.mxu0
    %v1050 = vadd.f32 0.0, %v1049
    %v1051 = vpop.f32.mrf.mxu0
    %v1052 = vpop.f32.mrf.mxu0
    %v1053 = vpop.f32.mrf.mxu0
    %1054 = vdwg.mxu0
    %v1056 = vrot.slane %v1050, 4
    %v1058 = vadd.f32 %v846, %v1056
    %v1059 = vxor.u32 %v1058, 2147483648
    %v1060 = vmul.f32 %v1059, 1.442695
    %v1061 = vpow.pop %v1060
    %v1062 = vadd.f32 %v1061, 1.0
    %v1063 = vrcp.pop %v1062
    %v1064 = vmul.f32 1.0, %v1063
    %v1065 = vtanh.pop %v1058
    %v1067 = vrot.slane %v1000, 6
    %v1069 = vmul.f32 %v1064, %v1067
    %1071 = vrot.lane.b32.xlu0 %v1065, 64
    %v1072 = vpop.permute.xlu0 %1071
    %v1074 = vmul.f32 %v1064, %v1072
    %1076 = vrot.lane.b32.xlu0 %v1074, 32
    %v1077 = vpop.permute.xlu0 %1076
    %v1079 = vadd.f32 %v1069, %v1077
    %v1080 = vtanh.pop %v1079
    %1082 = vrot.lane.b32.xlu0 %v1080, 64
    %v1083 = vpop.permute.xlu0 %1082
    %v1085 = vmul.f32 %v1064, %v1083
    %v1086 = vpack.c.bf16 %v1085, %v1085
    %v1088 = vrot.slane %v1086, 2
    %1089 = vrot.lane.b32.xlu0 %v1088, 32
    %v1090 = vpop.permute.xlu0 %1089
    %v1092 = vsel %vm117, %v1090, 0
    %1094 = vmatprep.subr.bf16.mxu0 0
    %1095 = vmatpush1.bf16.msra.mxu0 0
    %1096 = vmatprep.subr.bf16.mxu0 0
    %1097 = vmatpush1.bf16.msra.mxu0 0
    %1098 = vmatprep.subr.bf16.mxu0 0
    %1099 = vmatpush1.bf16.msra.mxu0 0
    %1100 = vmatprep.subr.bf16.mxu0 0
    %1101 = vmatpush1.bf16.msra.mxu0 0
    %1102 = vmatprep.subr.bf16.mxu0 0
    %1103 = vmatpush1.bf16.msra.mxu0 0
    %1104 = vmatprep.subr.bf16.mxu0 0
    %1105 = vmatpush1.bf16.msra.mxu0 0
    %1106 = vmatprep.subr.bf16.mxu0 0
    %1107 = vmatpush1.bf16.msra.mxu0 %v861
    %1108 = vmatprep.subr.bf16.mxu0 0
    %1109 = vmatpush1.bf16.msra.mxu0 %v860
    %1110 = vmatprep.subr.bf16.mxu0 0
    %1111 = vmatpush2.bf16.msra.mxu0 0
    %1112 = vmatprep.subr.bf16.mxu0 0
    %1113 = vmatpush2.bf16.msra.mxu0 0
    %1114 = vmatprep.subr.bf16.mxu0 0
    %1115 = vmatpush2.bf16.msra.mxu0 0
    %1116 = vmatprep.subr.bf16.mxu0 0
    %1117 = vmatpush2.bf16.msra.mxu0 0
    %1118 = vmatprep.subr.bf16.mxu0 0
    %1119 = vmatpush2.bf16.msra.mxu0 0
    %1120 = vmatprep.subr.bf16.mxu0 0
    %1121 = vmatpush2.bf16.msra.mxu0 0
    %1122 = vmatprep.subr.bf16.mxu0 0
    %1123 = vmatpush2.bf16.msra.mxu0 0
    %1124 = vmatprep.subr.bf16.mxu0 0
    %1125 = vmatpush2.bf16.msra.mxu0 0
    %1126 = vmatprep.mubr.bf16.mxu0 0
    %1127 = vmatmul.mubr.bf16.gmra.mxu0 %v1092
    %v1128 = vpop.f32.mrf.mxu0
    %v1129 = vadd.f32 0.0, %v1128
    %v1130 = vpop.f32.mrf.mxu0
    %v1131 = vpop.f32.mrf.mxu0
    %v1132 = vpop.f32.mrf.mxu0
    %1133 = vdwg.mxu0
    %v1135 = vrot.slane %v1129, 2
    %v1137 = vadd.f32 %v846, %v1135
    %v1138 = vxor.u32 %v1137, 2147483648
    %v1139 = vmul.f32 %v1138, 1.442695
    %v1140 = vpow.pop %v1139
    %v1141 = vadd.f32 %v1140, 1.0
    %v1142 = vrcp.pop %v1141
    %v1143 = vmul.f32 1.0, %v1142
    %v1144 = vtanh.pop %v1137
    %v1146 = vrot.slane %v1079, 6
    %v1148 = vmul.f32 %v1143, %v1146
    %1150 = vrot.lane.b32.xlu0 %v1144, 64
    %v1151 = vpop.permute.xlu0 %1150
    %v1153 = vmul.f32 %v1143, %v1151
    %1155 = vrot.lane.b32.xlu0 %v1153, 32
    %v1156 = vpop.permute.xlu0 %1155
    %v1158 = vadd.f32 %v1148, %v1156
    %v1159 = vtanh.pop %v1158
    %1161 = vrot.lane.b32.xlu0 %v1159, 64
    %v1162 = vpop.permute.xlu0 %1161
    %v1164 = vmul.f32 %v1143, %v1162
    %v1165 = vpack.c.bf16 %v1164, %v1164
    %v1167 = vrot.slane %v1165, 3
    %1168 = vrot.lane.b32.xlu0 %v1167, 32
    %v1169 = vpop.permute.xlu0 %1168
    %v1171 = vsel %vm117, %v1169, 0
    %1173 = vmatprep.subr.bf16.mxu0 0
    %1174 = vmatpush1.bf16.msra.mxu0 0
    %1175 = vmatprep.subr.bf16.mxu0 0
    %1176 = vmatpush1.bf16.msra.mxu0 0
    %1177 = vmatprep.subr.bf16.mxu0 0
    %1178 = vmatpush1.bf16.msra.mxu0 0
    %1179 = vmatprep.subr.bf16.mxu0 0
    %1180 = vmatpush1.bf16.msra.mxu0 0
    %1181 = vmatprep.subr.bf16.mxu0 0
    %1182 = vmatpush1.bf16.msra.mxu0 0
    %1183 = vmatprep.subr.bf16.mxu0 0
    %1184 = vmatpush1.bf16.msra.mxu0 0
    %1185 = vmatprep.subr.bf16.mxu0 0
    %1186 = vmatpush1.bf16.msra.mxu0 %v861
    %1187 = vmatprep.subr.bf16.mxu0 0
    %1188 = vmatpush1.bf16.msra.mxu0 %v860
    %1189 = vmatprep.subr.bf16.mxu0 0
    %1190 = vmatpush2.bf16.msra.mxu0 0
    %1191 = vmatprep.subr.bf16.mxu0 0
    %1192 = vmatpush2.bf16.msra.mxu0 0
    %1193 = vmatprep.subr.bf16.mxu0 0
    %1194 = vmatpush2.bf16.msra.mxu0 0
    %1195 = vmatprep.subr.bf16.mxu0 0
    %1196 = vmatpush2.bf16.msra.mxu0 0
    %1197 = vmatprep.subr.bf16.mxu0 0
    %1198 = vmatpush2.bf16.msra.mxu0 0
    %1199 = vmatprep.subr.bf16.mxu0 0
    %1200 = vmatpush2.bf16.msra.mxu0 0
    %1201 = vmatprep.subr.bf16.mxu0 0
    %1202 = vmatpush2.bf16.msra.mxu0 0
    %1203 = vmatprep.subr.bf16.mxu0 0
    %1204 = vmatpush2.bf16.msra.mxu0 0
    %1205 = vmatprep.mubr.bf16.mxu0 0
    %1206 = vmatmul.mubr.bf16.gmra.mxu0 %v1171
    %v1207 = vpop.f32.mrf.mxu0
    %v1208 = vadd.f32 0.0, %v1207
    %v1209 = vpop.f32.mrf.mxu0
    %v1210 = vpop.f32.mrf.mxu0
    %v1211 = vpop.f32.mrf.mxu0
    %1212 = vdwg.mxu0
    %v1213 = vadd.f32 %v849, %v1208
    %v1214 = vxor.u32 %v1213, 2147483648
    %v1215 = vmul.f32 %v1214, 1.442695
    %v1216 = vpow.pop %v1215
    %v1217 = vadd.f32 %v1216, 1.0
    %v1218 = vrcp.pop %v1217
    %v1219 = vmul.f32 1.0, %v1218
    %v1220 = vtanh.pop %v1213
    %v1222 = vrot.slane %v1158, 6
    %v1224 = vmul.f32 %v1219, %v1222
    %1226 = vrot.lane.b32.xlu0 %v1220, 64
    %v1227 = vpop.permute.xlu0 %1226
    %v1229 = vmul.f32 %v1219, %v1227
    %1231 = vrot.lane.b32.xlu0 %v1229, 32
    %v1232 = vpop.permute.xlu0 %1231
    %v1234 = vadd.f32 %v1224, %v1232
    %v1235 = vtanh.pop %v1234
    %1237 = vrot.lane.b32.xlu0 %v1235, 64
    %v1238 = vpop.permute.xlu0 %1237
    %v1240 = vmul.f32 %v1219, %v1238
    %v1241 = vpack.c.bf16 %v1240, %v1240
    %1243 = vrot.lane.b32.xlu0 %v1241, 32
    %v1244 = vpop.permute.xlu0 %1243
    %v1246 = vsel %vm117, %v1244, 0
    %1248 = vmatprep.subr.bf16.mxu0 0
    %1249 = vmatpush1.bf16.msra.mxu0 0
    %1250 = vmatprep.subr.bf16.mxu0 0
    %1251 = vmatpush1.bf16.msra.mxu0 0
    %1252 = vmatprep.subr.bf16.mxu0 0
    %1253 = vmatpush1.bf16.msra.mxu0 0
    %1254 = vmatprep.subr.bf16.mxu0 0
    %1255 = vmatpush1.bf16.msra.mxu0 0
    %1256 = vmatprep.subr.bf16.mxu0 0
    %1257 = vmatpush1.bf16.msra.mxu0 0
    %1258 = vmatprep.subr.bf16.mxu0 0
    %1259 = vmatpush1.bf16.msra.mxu0 0
    %1260 = vmatprep.subr.bf16.mxu0 0
    %1261 = vmatpush1.bf16.msra.mxu0 %v861
    %1262 = vmatprep.subr.bf16.mxu0 0
    %1263 = vmatpush1.bf16.msra.mxu0 %v860
    %1264 = vmatprep.subr.bf16.mxu0 0
    %1265 = vmatpush2.bf16.msra.mxu0 0
    %1266 = vmatprep.subr.bf16.mxu0 0
    %1267 = vmatpush2.bf16.msra.mxu0 0
    %1268 = vmatprep.subr.bf16.mxu0 0
    %1269 = vmatpush2.bf16.msra.mxu0 0
    %1270 = vmatprep.subr.bf16.mxu0 0
    %1271 = vmatpush2.bf16.msra.mxu0 0
    %1272 = vmatprep.subr.bf16.mxu0 0
    %1273 = vmatpush2.bf16.msra.mxu0 0
    %1274 = vmatprep.subr.bf16.mxu0 0
    %1275 = vmatpush2.bf16.msra.mxu0 0
    %1276 = vmatprep.subr.bf16.mxu0 0
    %1277 = vmatpush2.bf16.msra.mxu0 0
    %1278 = vmatprep.subr.bf16.mxu0 0
    %1279 = vmatpush2.bf16.msra.mxu0 0
    %1280 = vmatprep.mubr.bf16.mxu0 0
    %1281 = vmatmul.mubr.bf16.gmra.mxu0 %v1246
    %v1282 = vpop.f32.mrf.mxu0
    %v1283 = vadd.f32 0.0, %v1282
    %v1284 = vpop.f32.mrf.mxu0
    %v1285 = vpop.f32.mrf.mxu0
    %v1286 = vpop.f32.mrf.mxu0
    %1287 = vdwg.mxu0
    %v1289 = vrot.slane %v1283, 6
    %v1291 = vadd.f32 %v849, %v1289
    %v1292 = vxor.u32 %v1291, 2147483648
    %v1293 = vmul.f32 %v1292, 1.442695
    %v1294 = vpow.pop %v1293
    %v1295 = vadd.f32 %v1294, 1.0
    %v1296 = vrcp.pop %v1295
    %v1297 = vmul.f32 1.0, %v1296
    %v1298 = vtanh.pop %v1291
    %v1300 = vrot.slane %v1234, 6
    %v1302 = vmul.f32 %v1297, %v1300
    %1304 = vrot.lane.b32.xlu0 %v1298, 64
    %v1305 = vpop.permute.xlu0 %1304
    %v1307 = vmul.f32 %v1297, %v1305
    %1309 = vrot.lane.b32.xlu0 %v1307, 32
    %v1310 = vpop.permute.xlu0 %1309
    %v1312 = vadd.f32 %v1302, %v1310
    %v1313 = vtanh.pop %v1312
    %1315 = vrot.lane.b32.xlu0 %v1313, 64
    %v1316 = vpop.permute.xlu0 %1315
    %v1318 = vmul.f32 %v1297, %v1316
    %v1319 = vpack.c.bf16 %v1318, %v1318
    %v1321 = vrot.slane %v1319, 1
    %1322 = vrot.lane.b32.xlu0 %v1321, 32
    %v1323 = vpop.permute.xlu0 %1322
    %v1325 = vsel %vm117, %v1323, 0
    %1327 = vmatprep.subr.bf16.mxu0 0
    %1328 = vmatpush1.bf16.msra.mxu0 0
    %1329 = vmatprep.subr.bf16.mxu0 0
    %1330 = vmatpush1.bf16.msra.mxu0 0
    %1331 = vmatprep.subr.bf16.mxu0 0
    %1332 = vmatpush1.bf16.msra.mxu0 0
    %1333 = vmatprep.subr.bf16.mxu0 0
    %1334 = vmatpush1.bf16.msra.mxu0 0
    %1335 = vmatprep.subr.bf16.mxu0 0
    %1336 = vmatpush1.bf16.msra.mxu0 0
    %1337 = vmatprep.subr.bf16.mxu0 0
    %1338 = vmatpush1.bf16.msra.mxu0 0
    %1339 = vmatprep.subr.bf16.mxu0 0
    %1340 = vmatpush1.bf16.msra.mxu0 %v861
    %1341 = vmatprep.subr.bf16.mxu0 0
    %1342 = vmatpush1.bf16.msra.mxu0 %v860
    %1343 = vmatprep.subr.bf16.mxu0 0
    %1344 = vmatpush2.bf16.msra.mxu0 0
    %1345 = vmatprep.subr.bf16.mxu0 0
    %1346 = vmatpush2.bf16.msra.mxu0 0
    %1347 = vmatprep.subr.bf16.mxu0 0
    %1348 = vmatpush2.bf16.msra.mxu0 0
    %1349 = vmatprep.subr.bf16.mxu0 0
    %1350 = vmatpush2.bf16.msra.mxu0 0
    %1351 = vmatprep.subr.bf16.mxu0 0
    %1352 = vmatpush2.bf16.msra.mxu0 0
    %1353 = vmatprep.subr.bf16.mxu0 0
    %1354 = vmatpush2.bf16.msra.mxu0 0
    %1355 = vmatprep.subr.bf16.mxu0 0
    %1356 = vmatpush2.bf16.msra.mxu0 0
    %1357 = vmatprep.subr.bf16.mxu0 0
    %1358 = vmatpush2.bf16.msra.mxu0 0
    %1359 = vmatprep.mubr.bf16.mxu0 0
    %1360 = vmatmul.mubr.bf16.gmra.mxu0 %v1325
    %v1361 = vpop.f32.mrf.mxu0
    %v1362 = vadd.f32 0.0, %v1361
    %v1363 = vpop.f32.mrf.mxu0
    %v1364 = vpop.f32.mrf.mxu0
    %v1365 = vpop.f32.mrf.mxu0
    %1366 = vdwg.mxu0
    %v1368 = vrot.slane %v1362, 4
    %v1370 = vadd.f32 %v849, %v1368
    %v1371 = vxor.u32 %v1370, 2147483648
    %v1372 = vmul.f32 %v1371, 1.442695
    %v1373 = vpow.pop %v1372
    %v1374 = vadd.f32 %v1373, 1.0
    %v1375 = vrcp.pop %v1374
    %v1376 = vmul.f32 1.0, %v1375
    %v1377 = vtanh.pop %v1370
    %v1379 = vrot.slane %v1312, 6
    %v1381 = vmul.f32 %v1376, %v1379
    %1383 = vrot.lane.b32.xlu0 %v1377, 64
    %v1384 = vpop.permute.xlu0 %1383
    %v1386 = vmul.f32 %v1376, %v1384
    %1388 = vrot.lane.b32.xlu0 %v1386, 32
    %v1389 = vpop.permute.xlu0 %1388
    %v1391 = vadd.f32 %v1381, %v1389
    %v1392 = vtanh.pop %v1391
    %1394 = vrot.lane.b32.xlu0 %v1392, 64
    %v1395 = vpop.permute.xlu0 %1394
    %v1397 = vmul.f32 %v1376, %v1395
    %v1398 = vpack.c.bf16 %v1397, %v1397
    %v1400 = vrot.slane %v1398, 2
    %1401 = vrot.lane.b32.xlu0 %v1400, 32
    %v1402 = vpop.permute.xlu0 %1401
    %v1404 = vsel %vm117, %v1402, 0
    %1406 = vmatprep.subr.bf16.mxu0 0
    %1407 = vmatpush1.bf16.msra.mxu0 0
    %1408 = vmatprep.subr.bf16.mxu0 0
    %1409 = vmatpush1.bf16.msra.mxu0 0
    %1410 = vmatprep.subr.bf16.mxu0 0
    %1411 = vmatpush1.bf16.msra.mxu0 0
    %1412 = vmatprep.subr.bf16.mxu0 0
    %1413 = vmatpush1.bf16.msra.mxu0 0
    %1414 = vmatprep.subr.bf16.mxu0 0
    %1415 = vmatpush1.bf16.msra.mxu0 0
    %1416 = vmatprep.subr.bf16.mxu0 0
    %1417 = vmatpush1.bf16.msra.mxu0 0
    %1418 = vmatprep.subr.bf16.mxu0 0
    %1419 = vmatpush1.bf16.msra.mxu0 %v861
    %1420 = vmatprep.subr.bf16.mxu0 0
    %1421 = vmatpush1.bf16.msra.mxu0 %v860
    %1422 = vmatprep.subr.bf16.mxu0 0
    %1423 = vmatpush2.bf16.msra.mxu0 0
    %1424 = vmatprep.subr.bf16.mxu0 0
    %1425 = vmatpush2.bf16.msra.mxu0 0
    %1426 = vmatprep.subr.bf16.mxu0 0
    %1427 = vmatpush2.bf16.msra.mxu0 0
    %1428 = vmatprep.subr.bf16.mxu0 0
    %1429 = vmatpush2.bf16.msra.mxu0 0
    %1430 = vmatprep.subr.bf16.mxu0 0
    %1431 = vmatpush2.bf16.msra.mxu0 0
    %1432 = vmatprep.subr.bf16.mxu0 0
    %1433 = vmatpush2.bf16.msra.mxu0 0
    %1434 = vmatprep.subr.bf16.mxu0 0
    %1435 = vmatpush2.bf16.msra.mxu0 0
    %1436 = vmatprep.subr.bf16.mxu0 0
    %1437 = vmatpush2.bf16.msra.mxu0 0
    %1438 = vmatprep.mubr.bf16.mxu0 0
    %1439 = vmatmul.mubr.bf16.gmra.mxu0 %v1404
    %v1440 = vpop.f32.mrf.mxu0
    %v1441 = vadd.f32 0.0, %v1440
    %v1442 = vpop.f32.mrf.mxu0
    %v1443 = vpop.f32.mrf.mxu0
    %v1444 = vpop.f32.mrf.mxu0
    %1445 = vdwg.mxu0
    %v1447 = vrot.slane %v1441, 2
    %v1449 = vadd.f32 %v849, %v1447
    %v1450 = vxor.u32 %v1449, 2147483648
    %v1451 = vmul.f32 %v1450, 1.442695
    %v1452 = vpow.pop %v1451
    %v1453 = vadd.f32 %v1452, 1.0
    %v1454 = vrcp.pop %v1453
    %v1455 = vmul.f32 1.0, %v1454
    %v1456 = vtanh.pop %v1449
    %v1458 = vrot.slane %v1391, 6
    %v1460 = vmul.f32 %v1455, %v1458
    %1462 = vrot.lane.b32.xlu0 %v1456, 64
    %v1463 = vpop.permute.xlu0 %1462
    %v1465 = vmul.f32 %v1455, %v1463
    %1467 = vrot.lane.b32.xlu0 %v1465, 32
    %v1468 = vpop.permute.xlu0 %1467
    %v1470 = vadd.f32 %v1460, %v1468
    %v1471 = vtanh.pop %v1470
    %1473 = vrot.lane.b32.xlu0 %v1471, 64
    %v1474 = vpop.permute.xlu0 %1473
    %v1476 = vmul.f32 %v1455, %v1474
    %v1477 = vpack.c.bf16 %v1476, %v1476
    %v1478 = vld [vmem:[%s7] sm:$0xf]
    %v1479 = vld [vmem:[%s7 + $0x4] sm:$0xf]
    %v1480 = vld [vmem:[%s7 + $0x8] sm:$0xf]
    %v1481 = vld [vmem:[%s7 + $0xc] sm:$0xf]
    %v1482 = vld [vmem:[%s8] sm:$0x1]
    %v1484 = vlaneseq
    %v1485 = vshrl.u32 %v1484, 7
    %v1486 = vsub.s32 0, %v1485
    %v1487 = vrot.slane %v1482, %v1486
    %v1490 = vrot.slane %v1477, 3
    %1491 = vrot.lane.b32.xlu0 %v1490, 32
    %v1492 = vpop.permute.xlu0 %1491
    %v1497 = vunpack.c.l.b16 %v1478
    %v1498 = vunpack.c.l.b16 %v1479
    %v1499 = vunpack.c.l.b16 %v1480
    %v1500 = vunpack.c.l.b16 %v1481
    %v1501 = vpack.c.b16 %v1498, %v1497
    %v1502 = vpack.c.b16 %v1500, %v1499
    %v1506 = vsel %vm117, %v1492, 0
    %1508 = vmatprep.subr.bf16.mxu0 0
    %1509 = vmatpush1.bf16.msra.mxu0 0
    %1510 = vmatprep.subr.bf16.mxu0 0
    %1511 = vmatpush1.bf16.msra.mxu0 0
    %1512 = vmatprep.subr.bf16.mxu0 0
    %1513 = vmatpush1.bf16.msra.mxu0 0
    %1514 = vmatprep.subr.bf16.mxu0 0
    %1515 = vmatpush1.bf16.msra.mxu0 0
    %1516 = vmatprep.subr.bf16.mxu0 0
    %1517 = vmatpush1.bf16.msra.mxu0 0
    %1518 = vmatprep.subr.bf16.mxu0 0
    %1519 = vmatpush1.bf16.msra.mxu0 0
    %1520 = vmatprep.subr.bf16.mxu0 0
    %1521 = vmatpush1.bf16.msra.mxu0 %v1502
    %1522 = vmatprep.subr.bf16.mxu0 0
    %1523 = vmatpush1.bf16.msra.mxu0 %v1501
    %1524 = vmatprep.subr.bf16.mxu0 0
    %1525 = vmatpush2.bf16.msra.mxu0 0
    %1526 = vmatprep.subr.bf16.mxu0 0
    %1527 = vmatpush2.bf16.msra.mxu0 0
    %1528 = vmatprep.subr.bf16.mxu0 0
    %1529 = vmatpush2.bf16.msra.mxu0 0
    %1530 = vmatprep.subr.bf16.mxu0 0
    %1531 = vmatpush2.bf16.msra.mxu0 0
    %1532 = vmatprep.subr.bf16.mxu0 0
    %1533 = vmatpush2.bf16.msra.mxu0 0
    %1534 = vmatprep.subr.bf16.mxu0 0
    %1535 = vmatpush2.bf16.msra.mxu0 0
    %1536 = vmatprep.subr.bf16.mxu0 0
    %1537 = vmatpush2.bf16.msra.mxu0 0
    %1538 = vmatprep.subr.bf16.mxu0 0
    %1539 = vmatpush2.bf16.msra.mxu0 0
    %1540 = vmatprep.mubr.bf16.mxu0 0
    %1541 = vmatmul.mubr.bf16.gmra.mxu0 %v1506
    %v1542 = vpop.f32.mrf.mxu0
    %v1543 = vadd.f32 %v1487, %v1542
    %v1544 = vpop.f32.mrf.mxu0
    %v1545 = vpop.f32.mrf.mxu0
    %v1546 = vpop.f32.mrf.mxu0
    %1547 = vdwg.mxu0
    %vm1548 = vcmask 25600
    %1549 = vst.msk [vmem:[#allocation3] sm:$0x3] %vm1548, %v1543
    // Predicated region
    $region38: #{simple_lstm_forward.1} parent=1 // pred_check
      _
    $region39: #{simple_lstm_forward.1} parent=1 // pred_check_branch
      %1551 = sbr.rel (0) target = $region41
    $region40: #{simple_lstm_forward.1} parent=1 // pred_region
      %s1553 = ssub.s32 32, 32
      %1554 = vsyncadd [#allocation4], %s1553
      %s1556 = sshll.u32 [#allocation3], 4
      %s1557 = int_to_ptr.vmem [resolvable:$true] %s1556
      %1559 = dma.vmem_to_hbm [thread:$0]  %s1557, 32, %s9, [#allocation4]
    $region41: #{simple_lstm_forward.1} parent=1 // pred_fallthru
      _
    // Predicated region
    $region42: #{simple_lstm_forward.1} parent=1 // pred_check
      _
    $region43: #{simple_lstm_forward.1} parent=1 // pred_check_branch
      %1561 = sbr.rel (0) target = $region45
    $region44: #{simple_lstm_forward.1} parent=1 // pred_region
      %1562 = dma.done [#allocation4], 32
    $region45: #{simple_lstm_forward.1} parent=1 // pred_fallthru
      _
    %1563 = vsyncpa [#allocation4], 1

</llo_original>
